<compile_context>
chip_gen: v7x
topology: tpu7x:2x2x1
jax: 0.10.0
libtpu: 0.0.40
codegen_flags: <defaults>
</compile_context>

<pallas_src>
import functools

import jax
import jax.numpy as jnp
from jax.experimental import pallas as pl
from jax.experimental.pallas import tpu as pltpu

BN_EPS = 1e-5
NTYPES = ("header", "payload", "header_p")
N_LAYERS = 4
VOCAB = 256 + 1
MATMUL_DTYPE = jnp.bfloat16     # MXU operand dtype (accumulation stays float32)


def _round_up(n, m):
    return (n + m - 1) // m * m


# ----------------------------------------------------------------------------
# Fused Pallas kernel:
#   embedding gather + 4 x (SAGEConv 'mean' + bias + PReLU + folded eval-BN) for
#   every node type, the torch.cat over layers, and dgl.mean_nodes — one call.
# ----------------------------------------------------------------------------
def _fused_gcn_kernel(idx_ref, emb_ref, adj_ref, w_ref, p_ref, mean_ref,
                      nodeh_ref, gvec_ref, *, segments, h_feats, feat_w):
    """segments: static tuple of (row_offset, n_real, n_padded) per node type."""
    f32 = jnp.float32
    n_total = adj_ref.shape[0]
    n_layers = w_ref.shape[0]
    tbl_rows, emb_dim = emb_ref.shape
    n_types = len(segments)
    H = h_feats

    # ---- hoisted graph-static masks: one iota, reused by every layer -------------
    rid = jax.lax.broadcasted_iota(jnp.int32, (n_total, 1), 0)
    type_masks = [jnp.logical_and(rid >= r0, rid < r0 + n_pad)
                  for (r0, _, n_pad) in segments]
    real_mask = jnp.zeros((n_total, 1), f32)
    for (r0, n_real, _) in segments:
        real_mask = real_mask + jnp.where(
            jnp.logical_and(rid >= r0, rid < r0 + n_real), 1.0, 0.0)

    # ---- embedding lookup fused in-kernel (one-hot iota compare + MXU dot) -------
    col = jax.lax.broadcasted_iota(jnp.int32, (n_total, tbl_rows), 1)
    onehot = (col == idx_ref[...]).astype(f32)                     # [N, tbl_rows]
    h = jnp.dot(onehot, emb_ref[...], preferred_element_type=f32)  # [N, emb_dim]

    pad_w = feat_w - h_feats
    pad_cols = jnp.zeros((n_total, pad_w), f32) if pad_w > 0 else None   # hoisted
    if feat_w > emb_dim:
        h = jnp.concatenate([h, jnp.zeros((n_total, feat_w - emb_dim), f32)], axis=1)

    adj = adj_ref[...]                                             # [N, N] bf16
    layer_outs = []
    for l in range(n_layers):                 # fully unrolled: whole stack in one body
        h_m = h.astype(adj.dtype)
        # GraphSAGE 'mean' aggregation: block-diag row-normalized adjacency matmul
        neigh = jnp.dot(adj, h_m, preferred_element_type=f32)      # [N, feat_w]
        cat = jnp.concatenate([h_m, neigh.astype(adj.dtype)], axis=1)   # [N, 2*feat_w]
        # ONE lane-dense MXU push for all three node types' transforms:
        #   w_ref[l] column block t holds [w_self_t ; w_neigh_t]
        z = jnp.dot(cat, w_ref[l], preferred_element_type=f32)     # [N, 128]
        par = p_ref[l]                                             # [4, 128] f32
        z = z + par[0:1, :]                                        # bias (lane-packed)
        z = jnp.where(z > 0, z, par[1:2, :] * z)                   # PReLU (per-channel)
        z = z * par[2:3, :] + par[3:4, :]                          # folded eval-BatchNorm
        # per-row selection of this row's type block (hoisted masks, static lane slices)
        h_new = z[:, (n_types - 1) * H:n_types * H]
        for t in range(n_types - 2, -1, -1):
            h_new = jnp.where(type_masks[t], z[:, t * H:(t + 1) * H], h_new)
        layer_outs.append(h_new)
        h = jnp.concatenate([h_new, pad_cols], axis=1) if pad_w > 0 else h_new

    # torch.cat((h1..h4), dim=1): single lane-dense [N, 4*H = 128] store.
    # Padded rows are re-zeroed so node_h contains no garbage.
    node_h = jnp.concatenate(layer_outs, axis=1) * real_mask
    nodeh_ref[...] = node_h
    # dgl.mean_nodes per type: one tiny MXU matmul with the precomputed [T, N] averager.
    gv = jnp.dot(mean_ref[...], node_h, preferred_element_type=f32)
    gvec_ref[...] = gv[0:gvec_ref.shape[0], :]


# ----------------------------------------------------------------------------
# Parameter construction (mirrors the module __init__) and kernel-side packing
# ----------------------------------------------------------------------------
def init_sage_params(key, in_dim, out_dim):
    k1, k2 = jax.random.split(key)
    scale = 1.0 / jnp.sqrt(jnp.float32(in_dim))
    return {
        "w_self": jax.random.uniform(k1, (in_dim, out_dim), jnp.float32, -scale, scale),
        "w_neigh": jax.random.uniform(k2, (in_dim, out_dim), jnp.float32, -scale, scale),
        "bias": jnp.zeros((1, out_dim), jnp.float32),
        "alpha": jnp.full((1, out_dim), 0.25, jnp.float32),   # PReLU(h_feats) default
        "gamma": jnp.ones((1, out_dim), jnp.float32),         # BatchNorm1d defaults
        "beta": jnp.zeros((1, out_dim), jnp.float32),
        "running_mean": jnp.zeros((1, out_dim), jnp.float32),
        "running_var": jnp.ones((1, out_dim), jnp.float32),
    }


def init_model(key, embedding_size, h_feats):
    keys = jax.random.split(key, 3 + N_LAYERS)
    params = {
        "emb": {nt: 0.02 * jax.random.normal(keys[i], (VOCAB, embedding_size), jnp.float32)
                for i, nt in enumerate(NTYPES)},
        "layers": [],
    }
    for layer in range(N_LAYERS):
        in_dim = embedding_size if layer == 0 else h_feats
        lkeys = jax.random.split(keys[3 + layer], len(NTYPES))
        params["layers"].append(
            {nt: init_sage_params(lkeys[i], in_dim, h_feats) for i, nt in enumerate(NTYPES)})
    return params


def pack_params(params, embedding_size, h_feats):
    """Per layer: column-stack the 3 types' [w_self ; w_neigh] into one lane-dense
    [2*feat_w, pad(T*H, 128)] bf16 block, and lane-pack bias / PReLU-alpha / folded
    eval-BN scale+shift into a [4, pad(T*H,128)] f32 block."""
    feat_w = max(embedding_size, h_feats)
    th_pad = _round_up(len(NTYPES) * h_feats, 128)
    n_l = len(params["layers"])
    w_all = jnp.zeros((n_l, 2 * feat_w, th_pad), jnp.float32)
    p_all = jnp.zeros((n_l, 4, th_pad), jnp.float32)
    for l, layer in enumerate(params["layers"]):
        in_dim = embedding_size if l == 0 else h_feats
        for t, nt in enumerate(NTYPES):
            p = layer[nt]
            c0 = t * h_feats
            w_all = w_all.at[l, :in_dim, c0:c0 + h_feats].set(p["w_self"])
            w_all = w_all.at[l, feat_w:feat_w + in_dim, c0:c0 + h_feats].set(p["w_neigh"])
            scale = p["gamma"] * jax.lax.rsqrt(p["running_var"] + BN_EPS)   # f32 fold
            shift = p["beta"] - p["running_mean"] * scale
            p_all = p_all.at[l, 0, c0:c0 + h_feats].set(p["bias"][0])
            p_all = p_all.at[l, 1, c0:c0 + h_feats].set(p["alpha"][0])
            p_all = p_all.at[l, 2, c0:c0 + h_feats].set(scale[0])
            p_all = p_all.at[l, 3, c0:c0 + h_feats].set(shift[0])
    return w_all.astype(MATMUL_DTYPE), p_all


def stack_embeddings(emb_params):
    """Stack the 3 per-type embedding tables into one [pad(3*257,8), emb] f32 slab."""
    tbl = jnp.concatenate([emb_params[nt] for nt in NTYPES], axis=0)    # [3*257, emb]
    pad = _round_up(tbl.shape[0], 8) - tbl.shape[0]
    return jnp.pad(tbl, ((0, pad), (0, 0)))


def make_adj_norm(key, n):
    """Random directed adjacency (no self loops), degree >= 1, row-normalized."""
    a = (jax.random.uniform(key, (n, n)) < 0.3).astype(jnp.float32)
    a = a * (1.0 - jnp.eye(n, dtype=jnp.float32))
    ring = jnp.roll(jnp.eye(n, dtype=jnp.float32), 1, axis=1)
    a = jnp.maximum(a, ring)
    deg = jnp.sum(a, axis=1, keepdims=True)
    return a / jnp.maximum(deg, 1.0)


# ----------------------------------------------------------------------------
# One-time, graph-static preparation (hoisted OUT of the per-call hot path):
#   embedding index slab, block-diagonal bf16 adjacency, [T, N] averaging matrix.
# ----------------------------------------------------------------------------
def prepare_graph(feats, adjs):
    segments, idx_rows, blocks = [], [], []
    row = 0
    for t, nt in enumerate(NTYPES):
        idx = feats[nt].reshape(-1).astype(jnp.int32) + t * VOCAB     # stacked-table index
        n_t = int(idx.shape[0])
        n_pad = _round_up(n_t, 8)
        idx_rows.append(jnp.pad(idx, (0, n_pad - n_t), constant_values=t * VOCAB))
        blocks.append((row, jnp.pad(adjs[nt].astype(jnp.float32),
                                    ((0, n_pad - n_t), (0, n_pad - n_t)))))
        segments.append((row, n_t, n_pad))
        row += n_pad
    n_total = row
    adj = jnp.zeros((n_total, n_total), jnp.float32)                  # block-diag A_norm
    for r0, blk in blocks:
        adj = adj.at[r0:r0 + blk.shape[0], r0:r0 + blk.shape[0]].set(blk)
    mean_mat = jnp.zeros((8, n_total), jnp.float32)                   # sublane-padded [T,N]
    for t, (r0, n_real, _) in enumerate(segments):
        mean_mat = mean_mat.at[t, r0:r0 + n_real].set(1.0 / n_real)
    idx_slab = jnp.concatenate(idx_rows).reshape(-1, 1)
    return idx_slab, adj.astype(MATMUL_DTYPE), mean_mat, tuple(segments)


# ----------------------------------------------------------------------------
# Forward pass (mirrors GCN_Hetro.forward) — one fused pallas_call on the hot path
# ----------------------------------------------------------------------------
def gcn_hetro_forward(emb_stack, w_all, p_all, idx_slab, adj_bd, mean_mat, *,
                      segments, embedding_size, h_feats):
    n_total = adj_bd.shape[0]
    n_layers = w_all.shape[0]
    n_types = len(NTYPES)
    feat_w = max(embedding_size, h_feats)

    # TODO(synk): for large graphs (N >~ 4k) the dense [N,N] adjacency must be tiled
    #             (row-strip grid marked "parallel" for v7x's 2 TCs, K-reduction over
    #             column strips, vmem_limit_bytes sized for v7x's 64 MiB / v5e's 16 MiB
    #             default scoped VMEM); not needed at these sizes — gridless on purpose.
    kernel = functools.partial(_fused_gcn_kernel, segments=segments,
                               h_feats=h_feats, feat_w=feat_w)
    vmem = pl.BlockSpec(memory_space=pltpu.MemorySpace.VMEM)
    node_h, gvec = pl.pallas_call(
        kernel,
        out_shape=(
            jax.ShapeDtypeStruct((n_total, n_layers * h_feats), jnp.float32),
            jax.ShapeDtypeStruct((n_types, n_layers * h_feats), jnp.float32),
        ),
        in_specs=[vmem] * 6,
        out_specs=(vmem, vmem),
    )(idx_slab, emb_stack, adj_bd, w_all, p_all, mean_mat)

    # torch.cat((g_vec_h, g_vec_p, g_vec_hp), dim=1)
    g_vec = gvec.reshape(1, n_types * n_layers * h_feats)
    return g_vec, node_h


# TODO(synk): DGL multi-graph batching (segment-wise mean_nodes) is not modeled;
#             a single graph per call is assumed, matching per-type mean over all nodes.


if __name__ == "__main__":
    embedding_size, h_feats = 32, 32
    n_header, n_payload, n_header_p = 16, 32, 8

    root = jax.random.PRNGKey(0)
    k_par, k_fh, k_fp, k_fhp, k_ah, k_ap, k_ahp = jax.random.split(root, 7)

    params = init_model(k_par, embedding_size, h_feats)
    w_all, p_all = pack_params(params, embedding_size, h_feats)
    emb_stack = stack_embeddings(params["emb"])

    feats = {
        "header":   jax.random.randint(k_fh,  (n_header, 1),   0, VOCAB, jnp.int32),
        "payload":  jax.random.randint(k_fp,  (n_payload, 1),  0, VOCAB, jnp.int32),
        "header_p": jax.random.randint(k_fhp, (n_header_p, 1), 0, VOCAB, jnp.int32),
    }
    adjs = {
        "header":   make_adj_norm(k_ah,  n_header),
        "payload":  make_adj_norm(k_ap,  n_payload),
        "header_p": make_adj_norm(k_ahp, n_header_p),
    }

    # graph-static preprocessing: done ONCE, outside the per-call hot path
    idx_slab, adj_bd, mean_mat, segments = prepare_graph(feats, adjs)

    fwd = jax.jit(functools.partial(
        gcn_hetro_forward, segments=segments,
        embedding_size=embedding_size, h_feats=h_feats))
    g_vec, node_h = fwd(emb_stack, w_all, p_all, idx_slab, adj_bd, mean_mat)
    g_vec = jax.block_until_ready(g_vec)

    assert g_vec.shape == (1, len(NTYPES) * N_LAYERS * h_feats), g_vec.shape
    assert bool(jnp.all(jnp.isfinite(g_vec)))
    assert bool(jnp.all(jnp.isfinite(node_h)))
    print("KERNEL_OK")
</pallas_src>

<mosaic_0001>
module attributes {stable_mosaic.version = 11 : i64} {
  func.func @_fused_gcn_kernel(%arg0: memref<56x1xi32, #tpu.memory_space<vmem>>, %arg1: memref<776x32xf32, #tpu.memory_space<vmem>>, %arg2: memref<56x56xbf16, #tpu.memory_space<vmem>>, %arg3: memref<4x64x128xbf16, #tpu.memory_space<vmem>>, %arg4: memref<4x4x128xf32, #tpu.memory_space<vmem>>, %arg5: memref<8x56xf32, #tpu.memory_space<vmem>>, %arg6: memref<56x128xf32, #tpu.memory_space<vmem>>, %arg7: memref<3x128xf32, #tpu.memory_space<vmem>>) attributes {dimension_semantics = [], scalar_prefetch = 0 : i64, scratch_operands = 0 : i64, tpu.core_type = #tpu.core_type<tc>} {
    %0 = tpu.iota {dimensions = array<i32: 0>} : vector<56x1xi32>
    %c0_i32 = arith.constant 0 : i32
    %1 = vector.broadcast %c0_i32 : i32 to vector<56x1xi32>
    %2 = arith.cmpi sge, %0, %1 : vector<56x1xi32>
    %c16_i32 = arith.constant 16 : i32
    %3 = vector.broadcast %c16_i32 : i32 to vector<56x1xi32>
    %4 = arith.cmpi slt, %0, %3 : vector<56x1xi32>
    %5 = arith.andi %2, %4 : vector<56x1xi1>
    %c16_i32_0 = arith.constant 16 : i32
    %6 = vector.broadcast %c16_i32_0 : i32 to vector<56x1xi32>
    %7 = arith.cmpi sge, %0, %6 : vector<56x1xi32>
    %c48_i32 = arith.constant 48 : i32
    %8 = vector.broadcast %c48_i32 : i32 to vector<56x1xi32>
    %9 = arith.cmpi slt, %0, %8 : vector<56x1xi32>
    %10 = arith.andi %7, %9 : vector<56x1xi1>
    %cst = arith.constant 0.000000e+00 : f32
    %11 = vector.broadcast %cst : f32 to vector<56x1xf32>
    %c0_i32_1 = arith.constant 0 : i32
    %12 = vector.broadcast %c0_i32_1 : i32 to vector<56x1xi32>
    %13 = arith.cmpi sge, %0, %12 : vector<56x1xi32>
    %c16_i32_2 = arith.constant 16 : i32
    %14 = vector.broadcast %c16_i32_2 : i32 to vector<56x1xi32>
    %15 = arith.cmpi slt, %0, %14 : vector<56x1xi32>
    %16 = arith.andi %13, %15 : vector<56x1xi1>
    %cst_3 = arith.constant 1.000000e+00 : f32
    %cst_4 = arith.constant 0.000000e+00 : f32
    %17 = vector.broadcast %cst_3 : f32 to vector<56x1xf32>
    %18 = vector.broadcast %cst_4 : f32 to vector<56x1xf32>
    %19 = arith.select %16, %17, %18 : vector<56x1xi1>, vector<56x1xf32>
    %20 = arith.addf %11, %19 : vector<56x1xf32>
    %c16_i32_5 = arith.constant 16 : i32
    %21 = vector.broadcast %c16_i32_5 : i32 to vector<56x1xi32>
    %22 = arith.cmpi sge, %0, %21 : vector<56x1xi32>
    %c48_i32_6 = arith.constant 48 : i32
    %23 = vector.broadcast %c48_i32_6 : i32 to vector<56x1xi32>
    %24 = arith.cmpi slt, %0, %23 : vector<56x1xi32>
    %25 = arith.andi %22, %24 : vector<56x1xi1>
    %cst_7 = arith.constant 1.000000e+00 : f32
    %cst_8 = arith.constant 0.000000e+00 : f32
    %26 = vector.broadcast %cst_7 : f32 to vector<56x1xf32>
    %27 = vector.broadcast %cst_8 : f32 to vector<56x1xf32>
    %28 = arith.select %25, %26, %27 : vector<56x1xi1>, vector<56x1xf32>
    %29 = arith.addf %20, %28 : vector<56x1xf32>
    %c48_i32_9 = arith.constant 48 : i32
    %30 = vector.broadcast %c48_i32_9 : i32 to vector<56x1xi32>
    %31 = arith.cmpi sge, %0, %30 : vector<56x1xi32>
    %c56_i32 = arith.constant 56 : i32
    %32 = vector.broadcast %c56_i32 : i32 to vector<56x1xi32>
    %33 = arith.cmpi slt, %0, %32 : vector<56x1xi32>
    %34 = arith.andi %31, %33 : vector<56x1xi1>
    %cst_10 = arith.constant 1.000000e+00 : f32
    %cst_11 = arith.constant 0.000000e+00 : f32
    %35 = vector.broadcast %cst_10 : f32 to vector<56x1xf32>
    %36 = vector.broadcast %cst_11 : f32 to vector<56x1xf32>
    %37 = arith.select %34, %35, %36 : vector<56x1xi1>, vector<56x1xf32>
    %38 = arith.addf %29, %37 : vector<56x1xf32>
    %39 = tpu.iota {dimensions = array<i32: 1>} : vector<56x776xi32>
    %c0 = arith.constant 0 : index
    %c0_12 = arith.constant 0 : index
    %40 = vector.load %arg0[%c0, %c0_12] : memref<56x1xi32, #tpu.memory_space<vmem>>, vector<56x1xi32>
    %41 = vector.broadcast %40 : vector<56x1xi32> to vector<56x776xi32>
    %42 = arith.cmpi eq, %39, %41 : vector<56x776xi32>
    %43 = arith.extui %42 : vector<56x776xi1> to vector<56x776xi32>
    %44 = arith.sitofp %43 : vector<56x776xi32> to vector<56x776xf32>
    %c0_13 = arith.constant 0 : index
    %c0_14 = arith.constant 0 : index
    %45 = vector.load %arg1[%c0_13, %c0_14] : memref<776x32xf32, #tpu.memory_space<vmem>>, vector<776x32xf32>
    %cst_15 = arith.constant dense<0.000000e+00> : vector<56x32xf32>
    %46 = tpu.matmul %44, %45, %cst_15 {dimension_numbers = #tpu.dot_dimension_numbers<[1], [0], [0], [1], [0, 0, 1, 1], [], []>} : vector<56x776xf32>, vector<776x32xf32>, vector<56x32xf32> -> vector<56x32xf32>
    %c0_16 = arith.constant 0 : index
    %c0_17 = arith.constant 0 : index
    %47 = vector.load %arg2[%c0_16, %c0_17] : memref<56x56xbf16, #tpu.memory_space<vmem>>, vector<56x56xbf16>
    %48 = arith.truncf %46 : vector<56x32xf32> to vector<56x32xbf16>
    %cst_18 = arith.constant dense<0.000000e+00> : vector<56x32xf32>
    %49 = tpu.matmul %47, %48, %cst_18 {dimension_numbers = #tpu.dot_dimension_numbers<[1], [0], [0], [1], [0, 0, 1, 1], [], []>} : vector<56x56xbf16>, vector<56x32xbf16>, vector<56x32xf32> -> vector<56x32xf32>
    %50 = arith.truncf %49 : vector<56x32xf32> to vector<56x32xbf16>
    %51 = tpu.concatenate %48, %50 in 1 : vector<56x32xbf16>, vector<56x32xbf16> -> vector<56x64xbf16>
    %c0_19 = arith.constant 0 : index
    %c0_20 = arith.constant 0 : index
    %c0_21 = arith.constant 0 : index
    %52 = vector.load %arg3[%c0_19, %c0_20, %c0_21] : memref<4x64x128xbf16, #tpu.memory_space<vmem>>, vector<1x64x128xbf16>
    %53 = vector.shape_cast %52 : vector<1x64x128xbf16> to vector<64x128xbf16>
    %cst_22 = arith.constant dense<0.000000e+00> : vector<56x128xf32>
    %54 = tpu.matmul %51, %53, %cst_22 {dimension_numbers = #tpu.dot_dimension_numbers<[1], [0], [0], [1], [0, 0, 1, 1], [], []>} : vector<56x64xbf16>, vector<64x128xbf16>, vector<56x128xf32> -> vector<56x128xf32>
    %c0_23 = arith.constant 0 : index
    %c0_24 = arith.constant 0 : index
    %c0_25 = arith.constant 0 : index
    %55 = vector.load %arg4[%c0_23, %c0_24, %c0_25] : memref<4x4x128xf32, #tpu.memory_space<vmem>>, vector<1x4x128xf32>
    %56 = vector.shape_cast %55 : vector<1x4x128xf32> to vector<4x128xf32>
    %57 = vector.extract_strided_slice %56 {offsets = [0, 0], sizes = [1, 128], strides = [1, 1]} : vector<4x128xf32> to vector<1x128xf32>
    %58 = vector.broadcast %57 : vector<1x128xf32> to vector<56x128xf32>
    %59 = arith.addf %54, %58 : vector<56x128xf32>
    %cst_26 = arith.constant 0.000000e+00 : f32
    %60 = vector.broadcast %cst_26 : f32 to vector<56x128xf32>
    %61 = arith.cmpf ogt, %59, %60 : vector<56x128xf32>
    %62 = vector.extract_strided_slice %56 {offsets = [1, 0], sizes = [1, 128], strides = [1, 1]} : vector<4x128xf32> to vector<1x128xf32>
    %63 = vector.broadcast %62 : vector<1x128xf32> to vector<56x128xf32>
    %64 = arith.mulf %63, %59 : vector<56x128xf32>
    %65 = arith.select %61, %59, %64 : vector<56x128xi1>, vector<56x128xf32>
    %66 = vector.extract_strided_slice %56 {offsets = [2, 0], sizes = [1, 128], strides = [1, 1]} : vector<4x128xf32> to vector<1x128xf32>
    %67 = vector.broadcast %66 : vector<1x128xf32> to vector<56x128xf32>
    %68 = arith.mulf %65, %67 : vector<56x128xf32>
    %69 = vector.extract_strided_slice %56 {offsets = [3, 0], sizes = [1, 128], strides = [1, 1]} : vector<4x128xf32> to vector<1x128xf32>
    %70 = vector.broadcast %69 : vector<1x128xf32> to vector<56x128xf32>
    %71 = arith.addf %68, %70 : vector<56x128xf32>
    %72 = vector.extract_strided_slice %71 {offsets = [0, 64], sizes = [56, 32], strides = [1, 1]} : vector<56x128xf32> to vector<56x32xf32>
    %73 = vector.extract_strided_slice %71 {offsets = [0, 32], sizes = [56, 32], strides = [1, 1]} : vector<56x128xf32> to vector<56x32xf32>
    %74 = vector.shape_cast %10 : vector<56x1xi1> to vector<56x1xi1>
    %75 = vector.broadcast %74 : vector<56x1xi1> to vector<56x32xi1>
    %76 = arith.select %75, %73, %72 : vector<56x32xi1>, vector<56x32xf32>
    %77 = vector.extract_strided_slice %71 {offsets = [0, 0], sizes = [56, 32], strides = [1, 1]} : vector<56x128xf32> to vector<56x32xf32>
    %78 = vector.shape_cast %5 : vector<56x1xi1> to vector<56x1xi1>
    %79 = vector.broadcast %78 : vector<56x1xi1> to vector<56x32xi1>
    %80 = arith.select %79, %77, %76 : vector<56x32xi1>, vector<56x32xf32>
    %81 = arith.truncf %80 : vector<56x32xf32> to vector<56x32xbf16>
    %cst_27 = arith.constant dense<0.000000e+00> : vector<56x32xf32>
    %82 = tpu.matmul %47, %81, %cst_27 {dimension_numbers = #tpu.dot_dimension_numbers<[1], [0], [0], [1], [0, 0, 1, 1], [], []>} : vector<56x56xbf16>, vector<56x32xbf16>, vector<56x32xf32> -> vector<56x32xf32>
    %83 = arith.truncf %82 : vector<56x32xf32> to vector<56x32xbf16>
    %84 = tpu.concatenate %81, %83 in 1 : vector<56x32xbf16>, vector<56x32xbf16> -> vector<56x64xbf16>
    %c1 = arith.constant 1 : index
    %c0_28 = arith.constant 0 : index
    %c0_29 = arith.constant 0 : index
    %85 = vector.load %arg3[%c1, %c0_28, %c0_29] : memref<4x64x128xbf16, #tpu.memory_space<vmem>>, vector<1x64x128xbf16>
    %86 = vector.shape_cast %85 : vector<1x64x128xbf16> to vector<64x128xbf16>
    %cst_30 = arith.constant dense<0.000000e+00> : vector<56x128xf32>
    %87 = tpu.matmul %84, %86, %cst_30 {dimension_numbers = #tpu.dot_dimension_numbers<[1], [0], [0], [1], [0, 0, 1, 1], [], []>} : vector<56x64xbf16>, vector<64x128xbf16>, vector<56x128xf32> -> vector<56x128xf32>
    %c1_31 = arith.constant 1 : index
    %c0_32 = arith.constant 0 : index
    %c0_33 = arith.constant 0 : index
    %88 = vector.load %arg4[%c1_31, %c0_32, %c0_33] : memref<4x4x128xf32, #tpu.memory_space<vmem>>, vector<1x4x128xf32>
    %89 = vector.shape_cast %88 : vector<1x4x128xf32> to vector<4x128xf32>
    %90 = vector.extract_strided_slice %89 {offsets = [0, 0], sizes = [1, 128], strides = [1, 1]} : vector<4x128xf32> to vector<1x128xf32>
    %91 = vector.broadcast %90 : vector<1x128xf32> to vector<56x128xf32>
    %92 = arith.addf %87, %91 : vector<56x128xf32>
    %cst_34 = arith.constant 0.000000e+00 : f32
    %93 = vector.broadcast %cst_34 : f32 to vector<56x128xf32>
    %94 = arith.cmpf ogt, %92, %93 : vector<56x128xf32>
    %95 = vector.extract_strided_slice %89 {offsets = [1, 0], sizes = [1, 128], strides = [1, 1]} : vector<4x128xf32> to vector<1x128xf32>
    %96 = vector.broadcast %95 : vector<1x128xf32> to vector<56x128xf32>
    %97 = arith.mulf %96, %92 : vector<56x128xf32>
    %98 = arith.select %94, %92, %97 : vector<56x128xi1>, vector<56x128xf32>
    %99 = vector.extract_strided_slice %89 {offsets = [2, 0], sizes = [1, 128], strides = [1, 1]} : vector<4x128xf32> to vector<1x128xf32>
    %100 = vector.broadcast %99 : vector<1x128xf32> to vector<56x128xf32>
    %101 = arith.mulf %98, %100 : vector<56x128xf32>
    %102 = vector.extract_strided_slice %89 {offsets = [3, 0], sizes = [1, 128], strides = [1, 1]} : vector<4x128xf32> to vector<1x128xf32>
    %103 = vector.broadcast %102 : vector<1x128xf32> to vector<56x128xf32>
    %104 = arith.addf %101, %103 : vector<56x128xf32>
    %105 = vector.extract_strided_slice %104 {offsets = [0, 64], sizes = [56, 32], strides = [1, 1]} : vector<56x128xf32> to vector<56x32xf32>
    %106 = vector.extract_strided_slice %104 {offsets = [0, 32], sizes = [56, 32], strides = [1, 1]} : vector<56x128xf32> to vector<56x32xf32>
    %107 = vector.shape_cast %10 : vector<56x1xi1> to vector<56x1xi1>
    %108 = vector.broadcast %107 : vector<56x1xi1> to vector<56x32xi1>
    %109 = arith.select %108, %106, %105 : vector<56x32xi1>, vector<56x32xf32>
    %110 = vector.extract_strided_slice %104 {offsets = [0, 0], sizes = [56, 32], strides = [1, 1]} : vector<56x128xf32> to vector<56x32xf32>
    %111 = vector.shape_cast %5 : vector<56x1xi1> to vector<56x1xi1>
    %112 = vector.broadcast %111 : vector<56x1xi1> to vector<56x32xi1>
    %113 = arith.select %112, %110, %109 : vector<56x32xi1>, vector<56x32xf32>
    %114 = arith.truncf %113 : vector<56x32xf32> to vector<56x32xbf16>
    %cst_35 = arith.constant dense<0.000000e+00> : vector<56x32xf32>
    %115 = tpu.matmul %47, %114, %cst_35 {dimension_numbers = #tpu.dot_dimension_numbers<[1], [0], [0], [1], [0, 0, 1, 1], [], []>} : vector<56x56xbf16>, vector<56x32xbf16>, vector<56x32xf32> -> vector<56x32xf32>
    %116 = arith.truncf %115 : vector<56x32xf32> to vector<56x32xbf16>
    %117 = tpu.concatenate %114, %116 in 1 : vector<56x32xbf16>, vector<56x32xbf16> -> vector<56x64xbf16>
    %c2 = arith.constant 2 : index
    %c0_36 = arith.constant 0 : index
    %c0_37 = arith.constant 0 : index
    %118 = vector.load %arg3[%c2, %c0_36, %c0_37] : memref<4x64x128xbf16, #tpu.memory_space<vmem>>, vector<1x64x128xbf16>
    %119 = vector.shape_cast %118 : vector<1x64x128xbf16> to vector<64x128xbf16>
    %cst_38 = arith.constant dense<0.000000e+00> : vector<56x128xf32>
    %120 = tpu.matmul %117, %119, %cst_38 {dimension_numbers = #tpu.dot_dimension_numbers<[1], [0], [0], [1], [0, 0, 1, 1], [], []>} : vector<56x64xbf16>, vector<64x128xbf16>, vector<56x128xf32> -> vector<56x128xf32>
    %c2_39 = arith.constant 2 : index
    %c0_40 = arith.constant 0 : index
    %c0_41 = arith.constant 0 : index
    %121 = vector.load %arg4[%c2_39, %c0_40, %c0_41] : memref<4x4x128xf32, #tpu.memory_space<vmem>>, vector<1x4x128xf32>
    %122 = vector.shape_cast %121 : vector<1x4x128xf32> to vector<4x128xf32>
    %123 = vector.extract_strided_slice %122 {offsets = [0, 0], sizes = [1, 128], strides = [1, 1]} : vector<4x128xf32> to vector<1x128xf32>
    %124 = vector.broadcast %123 : vector<1x128xf32> to vector<56x128xf32>
    %125 = arith.addf %120, %124 : vector<56x128xf32>
    %cst_42 = arith.constant 0.000000e+00 : f32
    %126 = vector.broadcast %cst_42 : f32 to vector<56x128xf32>
    %127 = arith.cmpf ogt, %125, %126 : vector<56x128xf32>
    %128 = vector.extract_strided_slice %122 {offsets = [1, 0], sizes = [1, 128], strides = [1, 1]} : vector<4x128xf32> to vector<1x128xf32>
    %129 = vector.broadcast %128 : vector<1x128xf32> to vector<56x128xf32>
    %130 = arith.mulf %129, %125 : vector<56x128xf32>
    %131 = arith.select %127, %125, %130 : vector<56x128xi1>, vector<56x128xf32>
    %132 = vector.extract_strided_slice %122 {offsets = [2, 0], sizes = [1, 128], strides = [1, 1]} : vector<4x128xf32> to vector<1x128xf32>
    %133 = vector.broadcast %132 : vector<1x128xf32> to vector<56x128xf32>
    %134 = arith.mulf %131, %133 : vector<56x128xf32>
    %135 = vector.extract_strided_slice %122 {offsets = [3, 0], sizes = [1, 128], strides = [1, 1]} : vector<4x128xf32> to vector<1x128xf32>
    %136 = vector.broadcast %135 : vector<1x128xf32> to vector<56x128xf32>
    %137 = arith.addf %134, %136 : vector<56x128xf32>
    %138 = vector.extract_strided_slice %137 {offsets = [0, 64], sizes = [56, 32], strides = [1, 1]} : vector<56x128xf32> to vector<56x32xf32>
    %139 = vector.extract_strided_slice %137 {offsets = [0, 32], sizes = [56, 32], strides = [1, 1]} : vector<56x128xf32> to vector<56x32xf32>
    %140 = vector.shape_cast %10 : vector<56x1xi1> to vector<56x1xi1>
    %141 = vector.broadcast %140 : vector<56x1xi1> to vector<56x32xi1>
    %142 = arith.select %141, %139, %138 : vector<56x32xi1>, vector<56x32xf32>
    %143 = vector.extract_strided_slice %137 {offsets = [0, 0], sizes = [56, 32], strides = [1, 1]} : vector<56x128xf32> to vector<56x32xf32>
    %144 = vector.shape_cast %5 : vector<56x1xi1> to vector<56x1xi1>
    %145 = vector.broadcast %144 : vector<56x1xi1> to vector<56x32xi1>
    %146 = arith.select %145, %143, %142 : vector<56x32xi1>, vector<56x32xf32>
    %147 = arith.truncf %146 : vector<56x32xf32> to vector<56x32xbf16>
    %cst_43 = arith.constant dense<0.000000e+00> : vector<56x32xf32>
    %148 = tpu.matmul %47, %147, %cst_43 {dimension_numbers = #tpu.dot_dimension_numbers<[1], [0], [0], [1], [0, 0, 1, 1], [], []>} : vector<56x56xbf16>, vector<56x32xbf16>, vector<56x32xf32> -> vector<56x32xf32>
    %149 = arith.truncf %148 : vector<56x32xf32> to vector<56x32xbf16>
    %150 = tpu.concatenate %147, %149 in 1 : vector<56x32xbf16>, vector<56x32xbf16> -> vector<56x64xbf16>
    %c3 = arith.constant 3 : index
    %c0_44 = arith.constant 0 : index
    %c0_45 = arith.constant 0 : index
    %151 = vector.load %arg3[%c3, %c0_44, %c0_45] : memref<4x64x128xbf16, #tpu.memory_space<vmem>>, vector<1x64x128xbf16>
    %152 = vector.shape_cast %151 : vector<1x64x128xbf16> to vector<64x128xbf16>
    %cst_46 = arith.constant dense<0.000000e+00> : vector<56x128xf32>
    %153 = tpu.matmul %150, %152, %cst_46 {dimension_numbers = #tpu.dot_dimension_numbers<[1], [0], [0], [1], [0, 0, 1, 1], [], []>} : vector<56x64xbf16>, vector<64x128xbf16>, vector<56x128xf32> -> vector<56x128xf32>
    %c3_47 = arith.constant 3 : index
    %c0_48 = arith.constant 0 : index
    %c0_49 = arith.constant 0 : index
    %154 = vector.load %arg4[%c3_47, %c0_48, %c0_49] : memref<4x4x128xf32, #tpu.memory_space<vmem>>, vector<1x4x128xf32>
    %155 = vector.shape_cast %154 : vector<1x4x128xf32> to vector<4x128xf32>
    %156 = vector.extract_strided_slice %155 {offsets = [0, 0], sizes = [1, 128], strides = [1, 1]} : vector<4x128xf32> to vector<1x128xf32>
    %157 = vector.broadcast %156 : vector<1x128xf32> to vector<56x128xf32>
    %158 = arith.addf %153, %157 : vector<56x128xf32>
    %cst_50 = arith.constant 0.000000e+00 : f32
    %159 = vector.broadcast %cst_50 : f32 to vector<56x128xf32>
    %160 = arith.cmpf ogt, %158, %159 : vector<56x128xf32>
    %161 = vector.extract_strided_slice %155 {offsets = [1, 0], sizes = [1, 128], strides = [1, 1]} : vector<4x128xf32> to vector<1x128xf32>
    %162 = vector.broadcast %161 : vector<1x128xf32> to vector<56x128xf32>
    %163 = arith.mulf %162, %158 : vector<56x128xf32>
    %164 = arith.select %160, %158, %163 : vector<56x128xi1>, vector<56x128xf32>
    %165 = vector.extract_strided_slice %155 {offsets = [2, 0], sizes = [1, 128], strides = [1, 1]} : vector<4x128xf32> to vector<1x128xf32>
    %166 = vector.broadcast %165 : vector<1x128xf32> to vector<56x128xf32>
    %167 = arith.mulf %164, %166 : vector<56x128xf32>
    %168 = vector.extract_strided_slice %155 {offsets = [3, 0], sizes = [1, 128], strides = [1, 1]} : vector<4x128xf32> to vector<1x128xf32>
    %169 = vector.broadcast %168 : vector<1x128xf32> to vector<56x128xf32>
    %170 = arith.addf %167, %169 : vector<56x128xf32>
    %171 = vector.extract_strided_slice %170 {offsets = [0, 64], sizes = [56, 32], strides = [1, 1]} : vector<56x128xf32> to vector<56x32xf32>
    %172 = vector.extract_strided_slice %170 {offsets = [0, 32], sizes = [56, 32], strides = [1, 1]} : vector<56x128xf32> to vector<56x32xf32>
    %173 = vector.shape_cast %10 : vector<56x1xi1> to vector<56x1xi1>
    %174 = vector.broadcast %173 : vector<56x1xi1> to vector<56x32xi1>
    %175 = arith.select %174, %172, %171 : vector<56x32xi1>, vector<56x32xf32>
    %176 = vector.extract_strided_slice %170 {offsets = [0, 0], sizes = [56, 32], strides = [1, 1]} : vector<56x128xf32> to vector<56x32xf32>
    %177 = vector.shape_cast %5 : vector<56x1xi1> to vector<56x1xi1>
    %178 = vector.broadcast %177 : vector<56x1xi1> to vector<56x32xi1>
    %179 = arith.select %178, %176, %175 : vector<56x32xi1>, vector<56x32xf32>
    %180 = tpu.concatenate %80, %113, %146, %179 in 1 : vector<56x32xf32>, vector<56x32xf32>, vector<56x32xf32>, vector<56x32xf32> -> vector<56x128xf32>
    %181 = vector.broadcast %38 : vector<56x1xf32> to vector<56x128xf32>
    %182 = arith.mulf %180, %181 : vector<56x128xf32>
    %c0_51 = arith.constant 0 : index
    %c0_52 = arith.constant 0 : index
    %183 = vector.load %arg6[%c0_51, %c0_52] : memref<56x128xf32, #tpu.memory_space<vmem>>, vector<56x128xf32>
    tpu.vector_store %arg6[%c0_51, %c0_52], %182 {strides = array<i32>} : memref<56x128xf32, #tpu.memory_space<vmem>>, vector<56x128xf32>,
    %c0_53 = arith.constant 0 : index
    %c0_54 = arith.constant 0 : index
    %184 = vector.load %arg5[%c0_53, %c0_54] : memref<8x56xf32, #tpu.memory_space<vmem>>, vector<8x56xf32>
    %cst_55 = arith.constant dense<0.000000e+00> : vector<8x128xf32>
    %185 = tpu.matmul %184, %182, %cst_55 {dimension_numbers = #tpu.dot_dimension_numbers<[1], [0], [0], [1], [0, 0, 1, 1], [], []>} : vector<8x56xf32>, vector<56x128xf32>, vector<8x128xf32> -> vector<8x128xf32>
    %186 = vector.extract_strided_slice %185 {offsets = [0, 0], sizes = [3, 128], strides = [1, 1]} : vector<8x128xf32> to vector<3x128xf32>
    %c0_56 = arith.constant 0 : index
    %c0_57 = arith.constant 0 : index
    %187 = vector.load %arg7[%c0_56, %c0_57] : memref<3x128xf32, #tpu.memory_space<vmem>>, vector<3x128xf32>
    tpu.vector_store %arg7[%c0_56, %c0_57], %186 {strides = array<i32>} : memref<3x128xf32, #tpu.memory_space<vmem>>, vector<3x128xf32>,
    return
  }
}

</mosaic_0001>

<llo_original>
// kernel: gcn_hetro_forward.1
$region0: #{gcn_hetro_forward.1}
  #allocation0 [shape = 'u32[]', space=smem, size = 0x4, offset = 0x4, fixed_abs, tag = 'smem constant byte address 0x4 - core index']
  #allocation1 [shape = 'u32[144,128]{1,0:T(1,128)}', space=vmem, size = 0x12000, scoped, tag = 'internal scratch']
  %s0 = inlined_call_operand.vmem [shape: s32[56,1], index: 0, kind: input, shape index: {}]
  %s1 = inlined_call_operand.vmem [shape: f32[776,32], index: 1, kind: input, shape index: {}]
  %s2 = inlined_call_operand.vmem [shape: bf16[56,56], index: 2, kind: input, shape index: {}]
  %s3 = inlined_call_operand.vmem [shape: bf16[4,64,128], index: 3, kind: input, shape index: {}]
  %s4 = inlined_call_operand.vmem [shape: f32[4,4,128], index: 4, kind: input, shape index: {}]
  %s5 = inlined_call_operand.vmem [shape: f32[8,56], index: 5, kind: input, shape index: {}]
  %s6 = inlined_call_operand.hbm [shape: f32[56,128], index: 6, kind: output, shape index: {0}]
  %s7 = inlined_call_operand.vmem [shape: f32[3,128], index: 7, kind: output, shape index: {1}]
  %8 = xla_tuple %s6, %s7
  %s9 = sld [smem:[#allocation0]]
  $region42: #{gcn_hetro_forward.1} parent=0
    _
  %s11 = ssub.s32 1, %s9
  %s12 = scalar_select 0, %s11, %s9
  $region1: #{gcn_hetro_forward.1} parent=0
    #allocation2 [shape = 'u8[28672]{0}', space=vmem, size = 0x7000, scoped, tag = 'output window, operand 0, single buffered']
    #allocation3 [shape = 's32[1]{0}', space=sflag, size = 0x4, scoped, tag = 'scoped memory for gcn_hetro_forward.1']
    %13 = vsyncpa [#allocation3], 0
    // Predicated region
    $region2: #{gcn_hetro_forward.1} parent=1 // pred_check
      _
    $region3: #{gcn_hetro_forward.1} parent=1 // pred_check_branch
      %15 = sbr.rel (0) target = $region5
    $region4: #{gcn_hetro_forward.1} parent=1 // pred_region
      _
    $region5: #{gcn_hetro_forward.1} parent=1 // pred_fallthru
      _
    // Predicated region
    $region6: #{gcn_hetro_forward.1} parent=1 // pred_check
      _
    $region7: #{gcn_hetro_forward.1} parent=1 // pred_check_branch
      %17 = sbr.rel (0) target = $region9
    $region8: #{gcn_hetro_forward.1} parent=1 // pred_region
      _
    $region9: #{gcn_hetro_forward.1} parent=1 // pred_fallthru
      _
    // Predicated region
    $region10: #{gcn_hetro_forward.1} parent=1 // pred_check
      _
    $region11: #{gcn_hetro_forward.1} parent=1 // pred_check_branch
      %19 = sbr.rel (0) target = $region13
    $region12: #{gcn_hetro_forward.1} parent=1 // pred_region
      _
    $region13: #{gcn_hetro_forward.1} parent=1 // pred_fallthru
      _
    // Predicated region
    $region14: #{gcn_hetro_forward.1} parent=1 // pred_check
      _
    $region15: #{gcn_hetro_forward.1} parent=1 // pred_check_branch
      %21 = sbr.rel (0) target = $region17
    $region16: #{gcn_hetro_forward.1} parent=1 // pred_region
      _
    $region17: #{gcn_hetro_forward.1} parent=1 // pred_fallthru
      _
    // Predicated region
    $region18: #{gcn_hetro_forward.1} parent=1 // pred_check
      _
    $region19: #{gcn_hetro_forward.1} parent=1 // pred_check_branch
      %23 = sbr.rel (0) target = $region21
    $region20: #{gcn_hetro_forward.1} parent=1 // pred_region
      _
    $region21: #{gcn_hetro_forward.1} parent=1 // pred_fallthru
      _
    // Predicated region
    $region22: #{gcn_hetro_forward.1} parent=1 // pred_check
      _
    $region23: #{gcn_hetro_forward.1} parent=1 // pred_check_branch
      %25 = sbr.rel (0) target = $region25
    $region24: #{gcn_hetro_forward.1} parent=1 // pred_region
      _
    $region25: #{gcn_hetro_forward.1} parent=1 // pred_fallthru
      _
    %v27 = vlaneseq
    %v28 = vshrl.u32 %v27, 7
    %v29 = vadd.s32 %v28, 8
    %v30 = vadd.s32 %v28, 16
    %v31 = vadd.s32 %v28, 24
    %v32 = vadd.s32 %v28, 32
    %v33 = vadd.s32 %v28, 40
    %v34 = vadd.s32 %v28, 48
    %vm35 = vcmp.ge.s32.totalorder %v28, 0
    %vm36 = vcmp.ge.s32.totalorder %v29, 0
    %vm37 = vcmp.ge.s32.totalorder %v30, 0
    %vm38 = vcmp.ge.s32.totalorder %v31, 0
    %vm39 = vcmp.ge.s32.totalorder %v32, 0
    %vm40 = vcmp.ge.s32.totalorder %v33, 0
    %vm41 = vcmp.ge.s32.totalorder %v34, 0
    %vm42 = vcmp.lt.s32.totalorder %v28, 16
    %vm43 = vcmp.lt.s32.totalorder %v29, 16
    %vm44 = vcmp.lt.s32.totalorder %v30, 16
    %vm45 = vcmp.lt.s32.totalorder %v31, 16
    %vm46 = vcmp.lt.s32.totalorder %v32, 16
    %vm47 = vcmp.lt.s32.totalorder %v33, 16
    %vm48 = vcmp.lt.s32.totalorder %v34, 16
    %vm49 = vmand %vm35, %vm42
    %vm50 = vmand %vm36, %vm43
    %vm51 = vmand %vm37, %vm44
    %vm52 = vmand %vm38, %vm45
    %vm53 = vmand %vm39, %vm46
    %vm54 = vmand %vm40, %vm47
    %vm55 = vmand %vm41, %vm48
    %vm56 = vcmp.ge.s32.totalorder %v28, 16
    %vm57 = vcmp.ge.s32.totalorder %v29, 16
    %vm58 = vcmp.ge.s32.totalorder %v30, 16
    %vm59 = vcmp.ge.s32.totalorder %v31, 16
    %vm60 = vcmp.ge.s32.totalorder %v32, 16
    %vm61 = vcmp.ge.s32.totalorder %v33, 16
    %vm62 = vcmp.ge.s32.totalorder %v34, 16
    %vm63 = vcmp.lt.s32.totalorder %v28, 48
    %vm64 = vcmp.lt.s32.totalorder %v29, 48
    %vm65 = vcmp.lt.s32.totalorder %v30, 48
    %vm66 = vcmp.lt.s32.totalorder %v31, 48
    %vm67 = vcmp.lt.s32.totalorder %v32, 48
    %vm68 = vcmp.lt.s32.totalorder %v33, 48
    %vm69 = vcmp.lt.s32.totalorder %v34, 48
    %vm70 = vmand %vm56, %vm63
    %vm71 = vmand %vm57, %vm64
    %vm72 = vmand %vm58, %vm65
    %vm73 = vmand %vm59, %vm66
    %vm74 = vmand %vm60, %vm67
    %vm75 = vmand %vm61, %vm68
    %vm76 = vmand %vm62, %vm69
    %v77 = vsel %vm49, 1.0, 0.0
    %v78 = vsel %vm50, 1.0, 0.0
    %v79 = vsel %vm51, 1.0, 0.0
    %v80 = vsel %vm52, 1.0, 0.0
    %v81 = vsel %vm53, 1.0, 0.0
    %v82 = vsel %vm54, 1.0, 0.0
    %v83 = vsel %vm55, 1.0, 0.0
    %v84 = vadd.f32 %v77, 0.0
    %v85 = vadd.f32 %v78, 0.0
    %v86 = vadd.f32 %v79, 0.0
    %v87 = vadd.f32 %v80, 0.0
    %v88 = vadd.f32 %v81, 0.0
    %v89 = vadd.f32 %v82, 0.0
    %v90 = vadd.f32 %v83, 0.0
    %v91 = vsel %vm70, 1.0, 0.0
    %v92 = vsel %vm71, 1.0, 0.0
    %v93 = vsel %vm72, 1.0, 0.0
    %v94 = vsel %vm73, 1.0, 0.0
    %v95 = vsel %vm74, 1.0, 0.0
    %v96 = vsel %vm75, 1.0, 0.0
    %v97 = vsel %vm76, 1.0, 0.0
    %v98 = vadd.f32 %v84, %v91
    %v99 = vadd.f32 %v85, %v92
    %v100 = vadd.f32 %v86, %v93
    %v101 = vadd.f32 %v87, %v94
    %v102 = vadd.f32 %v88, %v95
    %v103 = vadd.f32 %v89, %v96
    %v104 = vadd.f32 %v90, %v97
    %vm105 = vcmp.ge.s32.totalorder %v28, 48
    %vm106 = vcmp.ge.s32.totalorder %v29, 48
    %vm107 = vcmp.ge.s32.totalorder %v30, 48
    %vm108 = vcmp.ge.s32.totalorder %v31, 48
    %vm109 = vcmp.ge.s32.totalorder %v32, 48
    %vm110 = vcmp.ge.s32.totalorder %v33, 48
    %vm111 = vcmp.ge.s32.totalorder %v34, 48
    %vm112 = vcmp.lt.s32.totalorder %v28, 56
    %vm113 = vcmp.lt.s32.totalorder %v29, 56
    %vm114 = vcmp.lt.s32.totalorder %v30, 56
    %vm115 = vcmp.lt.s32.totalorder %v31, 56
    %vm116 = vcmp.lt.s32.totalorder %v32, 56
    %vm117 = vcmp.lt.s32.totalorder %v33, 56
    %vm118 = vcmp.lt.s32.totalorder %v34, 56
    %vm119 = vmand %vm105, %vm112
    %vm120 = vmand %vm106, %vm113
    %vm121 = vmand %vm107, %vm114
    %vm122 = vmand %vm108, %vm115
    %vm123 = vmand %vm109, %vm116
    %vm124 = vmand %vm110, %vm117
    %vm125 = vmand %vm111, %vm118
    %v126 = vsel %vm119, 1.0, 0.0
    %v127 = vsel %vm120, 1.0, 0.0
    %v128 = vsel %vm121, 1.0, 0.0
    %v129 = vsel %vm122, 1.0, 0.0
    %v130 = vsel %vm123, 1.0, 0.0
    %v131 = vsel %vm124, 1.0, 0.0
    %v132 = vsel %vm125, 1.0, 0.0
    %v133 = vadd.f32 %v98, %v126
    %v134 = vadd.f32 %v99, %v127
    %v135 = vadd.f32 %v100, %v128
    %v136 = vadd.f32 %v101, %v129
    %v137 = vadd.f32 %v102, %v130
    %v138 = vadd.f32 %v103, %v131
    %v139 = vadd.f32 %v104, %v132
    %v140 = vlaneseq
    %v141 = vand.u32 %v140, 127
    %v142 = vadd.s32 %v141, 128
    %v143 = vadd.s32 %v141, 256
    %v144 = vadd.s32 %v141, 384
    %v145 = vadd.s32 %v141, 512
    %v146 = vadd.s32 %v141, 640
    %v147 = vadd.s32 %v141, 768
    %v148 = vld [vmem:[%s0] sm:$0xff]
    %v149 = vld [vmem:[%s0 + $0x8] sm:$0xff]
    %v150 = vld [vmem:[%s0 + $0x10] sm:$0xff]
    %v151 = vld [vmem:[%s0 + $0x18] sm:$0xff]
    %v152 = vld [vmem:[%s0 + $0x20] sm:$0xff]
    %v153 = vld [vmem:[%s0 + $0x28] sm:$0xff]
    %v154 = vld [vmem:[%s0 + $0x30] sm:$0xff]
    %155 = vset.pattern.permute.xlu0 0
    %156 = vperm.xlu0 %155, %v148
    %v157 = vpop.permute.xlu0 %156
    %158 = vset.pattern.permute.xlu0 0
    %159 = vperm.xlu0 %158, %v149
    %v160 = vpop.permute.xlu0 %159
    %161 = vset.pattern.permute.xlu0 0
    %162 = vperm.xlu0 %161, %v150
    %v163 = vpop.permute.xlu0 %162
    %164 = vset.pattern.permute.xlu0 0
    %165 = vperm.xlu0 %164, %v151
    %v166 = vpop.permute.xlu0 %165
    %167 = vset.pattern.permute.xlu0 0
    %168 = vperm.xlu0 %167, %v152
    %v169 = vpop.permute.xlu0 %168
    %170 = vset.pattern.permute.xlu0 0
    %171 = vperm.xlu0 %170, %v153
    %v172 = vpop.permute.xlu0 %171
    %173 = vset.pattern.permute.xlu0 0
    %174 = vperm.xlu0 %173, %v154
    %v175 = vpop.permute.xlu0 %174
    %vm176 = vcmp.eq.s32.totalorder %v141, %v157
    %vm177 = vcmp.eq.s32.totalorder %v142, %v157
    %vm178 = vcmp.eq.s32.totalorder %v143, %v157
    %vm179 = vcmp.eq.s32.totalorder %v144, %v157
    %vm180 = vcmp.eq.s32.totalorder %v145, %v157
    %vm181 = vcmp.eq.s32.totalorder %v146, %v157
    %vm182 = vcmp.eq.s32.totalorder %v147, %v157
    %vm183 = vcmp.eq.s32.totalorder %v141, %v160
    %vm184 = vcmp.eq.s32.totalorder %v142, %v160
    %vm185 = vcmp.eq.s32.totalorder %v143, %v160
    %vm186 = vcmp.eq.s32.totalorder %v144, %v160
    %vm187 = vcmp.eq.s32.totalorder %v145, %v160
    %vm188 = vcmp.eq.s32.totalorder %v146, %v160
    %vm189 = vcmp.eq.s32.totalorder %v147, %v160
    %vm190 = vcmp.eq.s32.totalorder %v141, %v163
    %vm191 = vcmp.eq.s32.totalorder %v142, %v163
    %vm192 = vcmp.eq.s32.totalorder %v143, %v163
    %vm193 = vcmp.eq.s32.totalorder %v144, %v163
    %vm194 = vcmp.eq.s32.totalorder %v145, %v163
    %vm195 = vcmp.eq.s32.totalorder %v146, %v163
    %vm196 = vcmp.eq.s32.totalorder %v147, %v163
    %vm197 = vcmp.eq.s32.totalorder %v141, %v166
    %vm198 = vcmp.eq.s32.totalorder %v142, %v166
    %vm199 = vcmp.eq.s32.totalorder %v143, %v166
    %vm200 = vcmp.eq.s32.totalorder %v144, %v166
    %vm201 = vcmp.eq.s32.totalorder %v145, %v166
    %vm202 = vcmp.eq.s32.totalorder %v146, %v166
    %vm203 = vcmp.eq.s32.totalorder %v147, %v166
    %vm204 = vcmp.eq.s32.totalorder %v141, %v169
    %vm205 = vcmp.eq.s32.totalorder %v142, %v169
    %vm206 = vcmp.eq.s32.totalorder %v143, %v169
    %vm207 = vcmp.eq.s32.totalorder %v144, %v169
    %vm208 = vcmp.eq.s32.totalorder %v145, %v169
    %vm209 = vcmp.eq.s32.totalorder %v146, %v169
    %vm210 = vcmp.eq.s32.totalorder %v147, %v169
    %vm211 = vcmp.eq.s32.totalorder %v141, %v172
    %vm212 = vcmp.eq.s32.totalorder %v142, %v172
    %vm213 = vcmp.eq.s32.totalorder %v143, %v172
    %vm214 = vcmp.eq.s32.totalorder %v144, %v172
    %vm215 = vcmp.eq.s32.totalorder %v145, %v172
    %vm216 = vcmp.eq.s32.totalorder %v146, %v172
    %vm217 = vcmp.eq.s32.totalorder %v147, %v172
    %vm218 = vcmp.eq.s32.totalorder %v141, %v175
    %vm219 = vcmp.eq.s32.totalorder %v142, %v175
    %vm220 = vcmp.eq.s32.totalorder %v143, %v175
    %vm221 = vcmp.eq.s32.totalorder %v144, %v175
    %vm222 = vcmp.eq.s32.totalorder %v145, %v175
    %vm223 = vcmp.eq.s32.totalorder %v146, %v175
    %vm224 = vcmp.eq.s32.totalorder %v147, %v175
    %v225 = vsel %vm176, 1, 0
    %v226 = vsel %vm177, 1, 0
    %v227 = vsel %vm178, 1, 0
    %v228 = vsel %vm179, 1, 0
    %v229 = vsel %vm180, 1, 0
    %v230 = vsel %vm181, 1, 0
    %v231 = vsel %vm182, 1, 0
    %v232 = vsel %vm183, 1, 0
    %v233 = vsel %vm184, 1, 0
    %v234 = vsel %vm185, 1, 0
    %v235 = vsel %vm186, 1, 0
    %v236 = vsel %vm187, 1, 0
    %v237 = vsel %vm188, 1, 0
    %v238 = vsel %vm189, 1, 0
    %v239 = vsel %vm190, 1, 0
    %v240 = vsel %vm191, 1, 0
    %v241 = vsel %vm192, 1, 0
    %v242 = vsel %vm193, 1, 0
    %v243 = vsel %vm194, 1, 0
    %v244 = vsel %vm195, 1, 0
    %v245 = vsel %vm196, 1, 0
    %v246 = vsel %vm197, 1, 0
    %v247 = vsel %vm198, 1, 0
    %v248 = vsel %vm199, 1, 0
    %v249 = vsel %vm200, 1, 0
    %v250 = vsel %vm201, 1, 0
    %v251 = vsel %vm202, 1, 0
    %v252 = vsel %vm203, 1, 0
    %v253 = vsel %vm204, 1, 0
    %v254 = vsel %vm205, 1, 0
    %v255 = vsel %vm206, 1, 0
    %v256 = vsel %vm207, 1, 0
    %v257 = vsel %vm208, 1, 0
    %v258 = vsel %vm209, 1, 0
    %v259 = vsel %vm210, 1, 0
    %v260 = vsel %vm211, 1, 0
    %v261 = vsel %vm212, 1, 0
    %v262 = vsel %vm213, 1, 0
    %v263 = vsel %vm214, 1, 0
    %v264 = vsel %vm215, 1, 0
    %v265 = vsel %vm216, 1, 0
    %v266 = vsel %vm217, 1, 0
    %v267 = vsel %vm218, 1, 0
    %v268 = vsel %vm219, 1, 0
    %v269 = vsel %vm220, 1, 0
    %v270 = vsel %vm221, 1, 0
    %v271 = vsel %vm222, 1, 0
    %v272 = vsel %vm223, 1, 0
    %v273 = vsel %vm224, 1, 0
    %v274 = vcvt.s32.f32 %v225
    %v275 = vcvt.s32.f32 %v226
    %v276 = vcvt.s32.f32 %v227
    %v277 = vcvt.s32.f32 %v228
    %v278 = vcvt.s32.f32 %v229
    %v279 = vcvt.s32.f32 %v230
    %v280 = vcvt.s32.f32 %v231
    %v281 = vcvt.s32.f32 %v232
    %v282 = vcvt.s32.f32 %v233
    %v283 = vcvt.s32.f32 %v234
    %v284 = vcvt.s32.f32 %v235
    %v285 = vcvt.s32.f32 %v236
    %v286 = vcvt.s32.f32 %v237
    %v287 = vcvt.s32.f32 %v238
    %v288 = vcvt.s32.f32 %v239
    %v289 = vcvt.s32.f32 %v240
    %v290 = vcvt.s32.f32 %v241
    %v291 = vcvt.s32.f32 %v242
    %v292 = vcvt.s32.f32 %v243
    %v293 = vcvt.s32.f32 %v244
    %v294 = vcvt.s32.f32 %v245
    %v295 = vcvt.s32.f32 %v246
    %v296 = vcvt.s32.f32 %v247
    %v297 = vcvt.s32.f32 %v248
    %v298 = vcvt.s32.f32 %v249
    %v299 = vcvt.s32.f32 %v250
    %v300 = vcvt.s32.f32 %v251
    %v301 = vcvt.s32.f32 %v252
    %v302 = vcvt.s32.f32 %v253
    %v303 = vcvt.s32.f32 %v254
    %v304 = vcvt.s32.f32 %v255
    %v305 = vcvt.s32.f32 %v256
    %v306 = vcvt.s32.f32 %v257
    %v307 = vcvt.s32.f32 %v258
    %v308 = vcvt.s32.f32 %v259
    %v309 = vcvt.s32.f32 %v260
    %v310 = vcvt.s32.f32 %v261
    %v311 = vcvt.s32.f32 %v262
    %v312 = vcvt.s32.f32 %v263
    %v313 = vcvt.s32.f32 %v264
    %v314 = vcvt.s32.f32 %v265
    %v315 = vcvt.s32.f32 %v266
    %v316 = vcvt.s32.f32 %v267
    %v317 = vcvt.s32.f32 %v268
    %v318 = vcvt.s32.f32 %v269
    %v319 = vcvt.s32.f32 %v270
    %v320 = vcvt.s32.f32 %v271
    %v321 = vcvt.s32.f32 %v272
    %v322 = vcvt.s32.f32 %v273
    %v323 = vld [vmem:[%s1] sm:$0xff]
    %v324 = vld [vmem:[%s1 + $0x8] sm:$0xff]
    %v325 = vld [vmem:[%s1 + $0x10] sm:$0xff]
    %v326 = vld [vmem:[%s1 + $0x18] sm:$0xff]
    %v327 = vld [vmem:[%s1 + $0x20] sm:$0xff]
    %v328 = vld [vmem:[%s1 + $0x28] sm:$0xff]
    %v329 = vld [vmem:[%s1 + $0x30] sm:$0xff]
    %v330 = vld [vmem:[%s1 + $0x38] sm:$0xff]
    %v331 = vld [vmem:[%s1 + $0x40] sm:$0xff]
    %v332 = vld [vmem:[%s1 + $0x48] sm:$0xff]
    %v333 = vld [vmem:[%s1 + $0x50] sm:$0xff]
    %v334 = vld [vmem:[%s1 + $0x58] sm:$0xff]
    %v335 = vld [vmem:[%s1 + $0x60] sm:$0xff]
    %v336 = vld [vmem:[%s1 + $0x68] sm:$0xff]
    %v337 = vld [vmem:[%s1 + $0x70] sm:$0xff]
    %v338 = vld [vmem:[%s1 + $0x78] sm:$0xff]
    %v339 = vld [vmem:[%s1 + $0x80] sm:$0xff]
    %v340 = vld [vmem:[%s1 + $0x88] sm:$0xff]
    %v341 = vld [vmem:[%s1 + $0x90] sm:$0xff]
    %v342 = vld [vmem:[%s1 + $0x98] sm:$0xff]
    %v343 = vld [vmem:[%s1 + $0xa0] sm:$0xff]
    %v344 = vld [vmem:[%s1 + $0xa8] sm:$0xff]
    %v345 = vld [vmem:[%s1 + $0xb0] sm:$0xff]
    %v346 = vld [vmem:[%s1 + $0xb8] sm:$0xff]
    %v347 = vld [vmem:[%s1 + $0xc0] sm:$0xff]
    %v348 = vld [vmem:[%s1 + $0xc8] sm:$0xff]
    %v349 = vld [vmem:[%s1 + $0xd0] sm:$0xff]
    %v350 = vld [vmem:[%s1 + $0xd8] sm:$0xff]
    %v351 = vld [vmem:[%s1 + $0xe0] sm:$0xff]
    %v352 = vld [vmem:[%s1 + $0xe8] sm:$0xff]
    %v353 = vld [vmem:[%s1 + $0xf0] sm:$0xff]
    %v354 = vld [vmem:[%s1 + $0xf8] sm:$0xff]
    %v355 = vld [vmem:[%s1 + $0x100] sm:$0xff]
    %v356 = vld [vmem:[%s1 + $0x108] sm:$0xff]
    %v357 = vld [vmem:[%s1 + $0x110] sm:$0xff]
    %v358 = vld [vmem:[%s1 + $0x118] sm:$0xff]
    %v359 = vld [vmem:[%s1 + $0x120] sm:$0xff]
    %v360 = vld [vmem:[%s1 + $0x128] sm:$0xff]
    %v361 = vld [vmem:[%s1 + $0x130] sm:$0xff]
    %v362 = vld [vmem:[%s1 + $0x138] sm:$0xff]
    %v363 = vld [vmem:[%s1 + $0x140] sm:$0xff]
    %v364 = vld [vmem:[%s1 + $0x148] sm:$0xff]
    %v365 = vld [vmem:[%s1 + $0x150] sm:$0xff]
    %v366 = vld [vmem:[%s1 + $0x158] sm:$0xff]
    %v367 = vld [vmem:[%s1 + $0x160] sm:$0xff]
    %v368 = vld [vmem:[%s1 + $0x168] sm:$0xff]
    %v369 = vld [vmem:[%s1 + $0x170] sm:$0xff]
    %v370 = vld [vmem:[%s1 + $0x178] sm:$0xff]
    %v371 = vld [vmem:[%s1 + $0x180] sm:$0xff]
    %v372 = vld [vmem:[%s1 + $0x188] sm:$0xff]
    %v373 = vld [vmem:[%s1 + $0x190] sm:$0xff]
    %v374 = vld [vmem:[%s1 + $0x198] sm:$0xff]
    %v375 = vld [vmem:[%s1 + $0x1a0] sm:$0xff]
    %v376 = vld [vmem:[%s1 + $0x1a8] sm:$0xff]
    %v377 = vld [vmem:[%s1 + $0x1b0] sm:$0xff]
    %v378 = vld [vmem:[%s1 + $0x1b8] sm:$0xff]
    %v379 = vld [vmem:[%s1 + $0x1c0] sm:$0xff]
    %v380 = vld [vmem:[%s1 + $0x1c8] sm:$0xff]
    %v381 = vld [vmem:[%s1 + $0x1d0] sm:$0xff]
    %v382 = vld [vmem:[%s1 + $0x1d8] sm:$0xff]
    %v383 = vld [vmem:[%s1 + $0x1e0] sm:$0xff]
    %v384 = vld [vmem:[%s1 + $0x1e8] sm:$0xff]
    %v385 = vld [vmem:[%s1 + $0x1f0] sm:$0xff]
    %v386 = vld [vmem:[%s1 + $0x1f8] sm:$0xff]
    %v387 = vld [vmem:[%s1 + $0x200] sm:$0xff]
    %v388 = vld [vmem:[%s1 + $0x208] sm:$0xff]
    %v389 = vld [vmem:[%s1 + $0x210] sm:$0xff]
    %v390 = vld [vmem:[%s1 + $0x218] sm:$0xff]
    %v391 = vld [vmem:[%s1 + $0x220] sm:$0xff]
    %v392 = vld [vmem:[%s1 + $0x228] sm:$0xff]
    %v393 = vld [vmem:[%s1 + $0x230] sm:$0xff]
    %v394 = vld [vmem:[%s1 + $0x238] sm:$0xff]
    %v395 = vld [vmem:[%s1 + $0x240] sm:$0xff]
    %v396 = vld [vmem:[%s1 + $0x248] sm:$0xff]
    %v397 = vld [vmem:[%s1 + $0x250] sm:$0xff]
    %v398 = vld [vmem:[%s1 + $0x258] sm:$0xff]
    %v399 = vld [vmem:[%s1 + $0x260] sm:$0xff]
    %v400 = vld [vmem:[%s1 + $0x268] sm:$0xff]
    %v401 = vld [vmem:[%s1 + $0x270] sm:$0xff]
    %v402 = vld [vmem:[%s1 + $0x278] sm:$0xff]
    %v403 = vld [vmem:[%s1 + $0x280] sm:$0xff]
    %v404 = vld [vmem:[%s1 + $0x288] sm:$0xff]
    %v405 = vld [vmem:[%s1 + $0x290] sm:$0xff]
    %v406 = vld [vmem:[%s1 + $0x298] sm:$0xff]
    %v407 = vld [vmem:[%s1 + $0x2a0] sm:$0xff]
    %v408 = vld [vmem:[%s1 + $0x2a8] sm:$0xff]
    %v409 = vld [vmem:[%s1 + $0x2b0] sm:$0xff]
    %v410 = vld [vmem:[%s1 + $0x2b8] sm:$0xff]
    %v411 = vld [vmem:[%s1 + $0x2c0] sm:$0xff]
    %v412 = vld [vmem:[%s1 + $0x2c8] sm:$0xff]
    %v413 = vld [vmem:[%s1 + $0x2d0] sm:$0xff]
    %v414 = vld [vmem:[%s1 + $0x2d8] sm:$0xff]
    %v415 = vld [vmem:[%s1 + $0x2e0] sm:$0xff]
    %v416 = vld [vmem:[%s1 + $0x2e8] sm:$0xff]
    %v417 = vld [vmem:[%s1 + $0x2f0] sm:$0xff]
    %v418 = vld [vmem:[%s1 + $0x2f8] sm:$0xff]
    %v419 = vld [vmem:[%s1 + $0x300] sm:$0xff]
    %vm420 = vcmask 64512
    %v422 = vsel %vm420, %v280, 0
    %v425 = vsel %vm420, %v287, 0
    %v428 = vsel %vm420, %v294, 0
    %v431 = vsel %vm420, %v301, 0
    %v434 = vsel %vm420, %v308, 0
    %v437 = vsel %vm420, %v315, 0
    %v440 = vsel %vm420, %v322, 0
    %442 = vmatprep.subr.mxu0 0.0
    %443 = vmatpush1.msra.mxu0 %v323
    %444 = vmatprep.subr.mxu0 0.0
    %445 = vmatpush1.msra.mxu0 %v324
    %446 = vmatprep.subr.mxu0 0.0
    %447 = vmatpush1.msra.mxu0 %v325
    %448 = vmatprep.subr.mxu0 0.0
    %449 = vmatpush1.msra.mxu0 %v326
    %450 = vmatprep.subr.mxu0 0.0
    %451 = vmatpush1.msra.mxu0 %v327
    %452 = vmatprep.subr.mxu0 0.0
    %453 = vmatpush1.msra.mxu0 %v328
    %454 = vmatprep.subr.mxu0 0.0
    %455 = vmatpush1.msra.mxu0 %v329
    %456 = vmatprep.subr.mxu0 0.0
    %457 = vmatpush1.msra.mxu0 %v330
    %458 = vmatprep.subr.mxu0 0.0
    %459 = vmatpush1.msra.mxu0 %v331
    %460 = vmatprep.subr.mxu0 0.0
    %461 = vmatpush1.msra.mxu0 %v332
    %462 = vmatprep.subr.mxu0 0.0
    %463 = vmatpush1.msra.mxu0 %v333
    %464 = vmatprep.subr.mxu0 0.0
    %465 = vmatpush1.msra.mxu0 %v334
    %466 = vmatprep.subr.mxu0 0.0
    %467 = vmatpush1.msra.mxu0 %v335
    %468 = vmatprep.subr.mxu0 0.0
    %469 = vmatpush1.msra.mxu0 %v336
    %470 = vmatprep.subr.mxu0 0.0
    %471 = vmatpush1.msra.mxu0 %v337
    %472 = vmatprep.subr.mxu0 0.0
    %473 = vmatpush1.msra.mxu0 %v338
    %474 = vmatprep.subr.mxu0 0.0
    %475 = vmatpush1.msra.mxu0 %v339
    %476 = vmatprep.subr.mxu0 0.0
    %477 = vmatpush1.msra.mxu0 %v340
    %478 = vmatprep.subr.mxu0 0.0
    %479 = vmatpush1.msra.mxu0 %v341
    %480 = vmatprep.subr.mxu0 0.0
    %481 = vmatpush1.msra.mxu0 %v342
    %482 = vmatprep.subr.mxu0 0.0
    %483 = vmatpush1.msra.mxu0 %v343
    %484 = vmatprep.subr.mxu0 0.0
    %485 = vmatpush1.msra.mxu0 %v344
    %486 = vmatprep.subr.mxu0 0.0
    %487 = vmatpush1.msra.mxu0 %v345
    %488 = vmatprep.subr.mxu0 0.0
    %489 = vmatpush1.msra.mxu0 %v346
    %490 = vmatprep.subr.mxu0 0.0
    %491 = vmatpush1.msra.mxu0 %v347
    %492 = vmatprep.subr.mxu0 0.0
    %493 = vmatpush1.msra.mxu0 %v348
    %494 = vmatprep.subr.mxu0 0.0
    %495 = vmatpush1.msra.mxu0 %v349
    %496 = vmatprep.subr.mxu0 0.0
    %497 = vmatpush1.msra.mxu0 %v350
    %498 = vmatprep.subr.mxu0 0.0
    %499 = vmatpush1.msra.mxu0 %v351
    %500 = vmatprep.subr.mxu0 0.0
    %501 = vmatpush1.msra.mxu0 %v352
    %502 = vmatprep.subr.mxu0 0.0
    %503 = vmatpush1.msra.mxu0 %v353
    %504 = vmatprep.subr.mxu0 0.0
    %505 = vmatpush1.msra.mxu0 %v354
    %506 = vmatprep.mubr.f32.mxu0 %v275
    %507 = vmatmul.mubr.f32.gmra.mrb[0].mxu0 %v274
    %v508 = vpop.f32.mrb[0].mxu0
    %v509 = vadd.f32 0.0, %v508
    %v510 = vpop.f32.mrb[0].mxu0
    %511 = vmatprep.mubr.f32.mxu0 %v282
    %512 = vmatmul.mubr.f32.gmra.mrb[0].mxu0 %v281
    %v513 = vpop.f32.mrb[0].mxu0
    %v514 = vadd.f32 0.0, %v513
    %v515 = vpop.f32.mrb[0].mxu0
    %516 = vmatprep.mubr.f32.mxu0 %v289
    %517 = vmatmul.mubr.f32.gmra.mrb[0].mxu0 %v288
    %v518 = vpop.f32.mrb[0].mxu0
    %v519 = vadd.f32 0.0, %v518
    %v520 = vpop.f32.mrb[0].mxu0
    %521 = vmatprep.mubr.f32.mxu0 %v296
    %522 = vmatmul.mubr.f32.gmra.mrb[0].mxu0 %v295
    %v523 = vpop.f32.mrb[0].mxu0
    %v524 = vadd.f32 0.0, %v523
    %v525 = vpop.f32.mrb[0].mxu0
    %526 = vmatprep.mubr.f32.mxu0 %v303
    %527 = vmatmul.mubr.f32.gmra.mrb[0].mxu0 %v302
    %v528 = vpop.f32.mrb[0].mxu0
    %v529 = vadd.f32 0.0, %v528
    %v530 = vpop.f32.mrb[0].mxu0
    %531 = vmatprep.mubr.f32.mxu0 %v310
    %532 = vmatmul.mubr.f32.gmra.mrb[0].mxu0 %v309
    %v533 = vpop.f32.mrb[0].mxu0
    %v534 = vadd.f32 0.0, %v533
    %v535 = vpop.f32.mrb[0].mxu0
    %536 = vmatprep.mubr.f32.mxu0 %v317
    %537 = vmatmul.mubr.f32.gmra.mrb[0].mxu0 %v316
    %v538 = vpop.f32.mrb[0].mxu0
    %v539 = vadd.f32 0.0, %v538
    %v540 = vpop.f32.mrb[0].mxu0
    %541 = vdwg.mxu0
    %542 = vmatprep.subr.mxu0 0.0
    %543 = vmatpush1.msra.mxu0 %v355
    %544 = vmatprep.subr.mxu0 0.0
    %545 = vmatpush1.msra.mxu0 %v356
    %546 = vmatprep.subr.mxu0 0.0
    %547 = vmatpush1.msra.mxu0 %v357
    %548 = vmatprep.subr.mxu0 0.0
    %549 = vmatpush1.msra.mxu0 %v358
    %550 = vmatprep.subr.mxu0 0.0
    %551 = vmatpush1.msra.mxu0 %v359
    %552 = vmatprep.subr.mxu0 0.0
    %553 = vmatpush1.msra.mxu0 %v360
    %554 = vmatprep.subr.mxu0 0.0
    %555 = vmatpush1.msra.mxu0 %v361
    %556 = vmatprep.subr.mxu0 0.0
    %557 = vmatpush1.msra.mxu0 %v362
    %558 = vmatprep.subr.mxu0 0.0
    %559 = vmatpush1.msra.mxu0 %v363
    %560 = vmatprep.subr.mxu0 0.0
    %561 = vmatpush1.msra.mxu0 %v364
    %562 = vmatprep.subr.mxu0 0.0
    %563 = vmatpush1.msra.mxu0 %v365
    %564 = vmatprep.subr.mxu0 0.0
    %565 = vmatpush1.msra.mxu0 %v366
    %566 = vmatprep.subr.mxu0 0.0
    %567 = vmatpush1.msra.mxu0 %v367
    %568 = vmatprep.subr.mxu0 0.0
    %569 = vmatpush1.msra.mxu0 %v368
    %570 = vmatprep.subr.mxu0 0.0
    %571 = vmatpush1.msra.mxu0 %v369
    %572 = vmatprep.subr.mxu0 0.0
    %573 = vmatpush1.msra.mxu0 %v370
    %574 = vmatprep.subr.mxu0 0.0
    %575 = vmatpush1.msra.mxu0 %v371
    %576 = vmatprep.subr.mxu0 0.0
    %577 = vmatpush1.msra.mxu0 %v372
    %578 = vmatprep.subr.mxu0 0.0
    %579 = vmatpush1.msra.mxu0 %v373
    %580 = vmatprep.subr.mxu0 0.0
    %581 = vmatpush1.msra.mxu0 %v374
    %582 = vmatprep.subr.mxu0 0.0
    %583 = vmatpush1.msra.mxu0 %v375
    %584 = vmatprep.subr.mxu0 0.0
    %585 = vmatpush1.msra.mxu0 %v376
    %586 = vmatprep.subr.mxu0 0.0
    %587 = vmatpush1.msra.mxu0 %v377
    %588 = vmatprep.subr.mxu0 0.0
    %589 = vmatpush1.msra.mxu0 %v378
    %590 = vmatprep.subr.mxu0 0.0
    %591 = vmatpush1.msra.mxu0 %v379
    %592 = vmatprep.subr.mxu0 0.0
    %593 = vmatpush1.msra.mxu0 %v380
    %594 = vmatprep.subr.mxu0 0.0
    %595 = vmatpush1.msra.mxu0 %v381
    %596 = vmatprep.subr.mxu0 0.0
    %597 = vmatpush1.msra.mxu0 %v382
    %598 = vmatprep.subr.mxu0 0.0
    %599 = vmatpush1.msra.mxu0 %v383
    %600 = vmatprep.subr.mxu0 0.0
    %601 = vmatpush1.msra.mxu0 %v384
    %602 = vmatprep.subr.mxu0 0.0
    %603 = vmatpush1.msra.mxu0 %v385
    %604 = vmatprep.subr.mxu0 0.0
    %605 = vmatpush1.msra.mxu0 %v386
    %606 = vmatprep.mubr.f32.mxu0 %v277
    %607 = vmatmul.mubr.f32.gmra.mrb[0].mxu0 %v276
    %v608 = vpop.f32.mrb[0].mxu0
    %v609 = vadd.f32 %v509, %v608
    %v610 = vpop.f32.mrb[0].mxu0
    %611 = vmatprep.mubr.f32.mxu0 %v284
    %612 = vmatmul.mubr.f32.gmra.mrb[0].mxu0 %v283
    %v613 = vpop.f32.mrb[0].mxu0
    %v614 = vadd.f32 %v514, %v613
    %v615 = vpop.f32.mrb[0].mxu0
    %616 = vmatprep.mubr.f32.mxu0 %v291
    %617 = vmatmul.mubr.f32.gmra.mrb[0].mxu0 %v290
    %v618 = vpop.f32.mrb[0].mxu0
    %v619 = vadd.f32 %v519, %v618
    %v620 = vpop.f32.mrb[0].mxu0
    %621 = vmatprep.mubr.f32.mxu0 %v298
    %622 = vmatmul.mubr.f32.gmra.mrb[0].mxu0 %v297
    %v623 = vpop.f32.mrb[0].mxu0
    %v624 = vadd.f32 %v524, %v623
    %v625 = vpop.f32.mrb[0].mxu0
    %626 = vmatprep.mubr.f32.mxu0 %v305
    %627 = vmatmul.mubr.f32.gmra.mrb[0].mxu0 %v304
    %v628 = vpop.f32.mrb[0].mxu0
    %v629 = vadd.f32 %v529, %v628
    %v630 = vpop.f32.mrb[0].mxu0
    %631 = vmatprep.mubr.f32.mxu0 %v312
    %632 = vmatmul.mubr.f32.gmra.mrb[0].mxu0 %v311
    %v633 = vpop.f32.mrb[0].mxu0
    %v634 = vadd.f32 %v534, %v633
    %v635 = vpop.f32.mrb[0].mxu0
    %636 = vmatprep.mubr.f32.mxu0 %v319
    %637 = vmatmul.mubr.f32.gmra.mrb[0].mxu0 %v318
    %v638 = vpop.f32.mrb[0].mxu0
    %v639 = vadd.f32 %v539, %v638
    %v640 = vpop.f32.mrb[0].mxu0
    %641 = vdwg.mxu0
    %642 = vmatprep.subr.mxu0 0.0
    %643 = vmatpush1.msra.mxu0 %v387
    %644 = vmatprep.subr.mxu0 0.0
    %645 = vmatpush1.msra.mxu0 %v388
    %646 = vmatprep.subr.mxu0 0.0
    %647 = vmatpush1.msra.mxu0 %v389
    %648 = vmatprep.subr.mxu0 0.0
    %649 = vmatpush1.msra.mxu0 %v390
    %650 = vmatprep.subr.mxu0 0.0
    %651 = vmatpush1.msra.mxu0 %v391
    %652 = vmatprep.subr.mxu0 0.0
    %653 = vmatpush1.msra.mxu0 %v392
    %654 = vmatprep.subr.mxu0 0.0
    %655 = vmatpush1.msra.mxu0 %v393
    %656 = vmatprep.subr.mxu0 0.0
    %657 = vmatpush1.msra.mxu0 %v394
    %658 = vmatprep.subr.mxu0 0.0
    %659 = vmatpush1.msra.mxu0 %v395
    %660 = vmatprep.subr.mxu0 0.0
    %661 = vmatpush1.msra.mxu0 %v396
    %662 = vmatprep.subr.mxu0 0.0
    %663 = vmatpush1.msra.mxu0 %v397
    %664 = vmatprep.subr.mxu0 0.0
    %665 = vmatpush1.msra.mxu0 %v398
    %666 = vmatprep.subr.mxu0 0.0
    %667 = vmatpush1.msra.mxu0 %v399
    %668 = vmatprep.subr.mxu0 0.0
    %669 = vmatpush1.msra.mxu0 %v400
    %670 = vmatprep.subr.mxu0 0.0
    %671 = vmatpush1.msra.mxu0 %v401
    %672 = vmatprep.subr.mxu0 0.0
    %673 = vmatpush1.msra.mxu0 %v402
    %674 = vmatprep.subr.mxu0 0.0
    %675 = vmatpush1.msra.mxu0 %v403
    %676 = vmatprep.subr.mxu0 0.0
    %677 = vmatpush1.msra.mxu0 %v404
    %678 = vmatprep.subr.mxu0 0.0
    %679 = vmatpush1.msra.mxu0 %v405
    %680 = vmatprep.subr.mxu0 0.0
    %681 = vmatpush1.msra.mxu0 %v406
    %682 = vmatprep.subr.mxu0 0.0
    %683 = vmatpush1.msra.mxu0 %v407
    %684 = vmatprep.subr.mxu0 0.0
    %685 = vmatpush1.msra.mxu0 %v408
    %686 = vmatprep.subr.mxu0 0.0
    %687 = vmatpush1.msra.mxu0 %v409
    %688 = vmatprep.subr.mxu0 0.0
    %689 = vmatpush1.msra.mxu0 %v410
    %690 = vmatprep.subr.mxu0 0.0
    %691 = vmatpush1.msra.mxu0 %v411
    %692 = vmatprep.subr.mxu0 0.0
    %693 = vmatpush1.msra.mxu0 %v412
    %694 = vmatprep.subr.mxu0 0.0
    %695 = vmatpush1.msra.mxu0 %v413
    %696 = vmatprep.subr.mxu0 0.0
    %697 = vmatpush1.msra.mxu0 %v414
    %698 = vmatprep.subr.mxu0 0.0
    %699 = vmatpush1.msra.mxu0 %v415
    %700 = vmatprep.subr.mxu0 0.0
    %701 = vmatpush1.msra.mxu0 %v416
    %702 = vmatprep.subr.mxu0 0.0
    %703 = vmatpush1.msra.mxu0 %v417
    %704 = vmatprep.subr.mxu0 0.0
    %705 = vmatpush1.msra.mxu0 %v418
    %706 = vmatprep.mubr.f32.mxu0 %v279
    %707 = vmatmul.mubr.f32.gmra.mrb[0].mxu0 %v278
    %v708 = vpop.f32.mrb[0].mxu0
    %v709 = vadd.f32 %v609, %v708
    %v710 = vpop.f32.mrb[0].mxu0
    %711 = vmatprep.mubr.f32.mxu0 %v286
    %712 = vmatmul.mubr.f32.gmra.mrb[0].mxu0 %v285
    %v713 = vpop.f32.mrb[0].mxu0
    %v714 = vadd.f32 %v614, %v713
    %v715 = vpop.f32.mrb[0].mxu0
    %716 = vmatprep.mubr.f32.mxu0 %v293
    %717 = vmatmul.mubr.f32.gmra.mrb[0].mxu0 %v292
    %v718 = vpop.f32.mrb[0].mxu0
    %v719 = vadd.f32 %v619, %v718
    %v720 = vpop.f32.mrb[0].mxu0
    %721 = vmatprep.mubr.f32.mxu0 %v300
    %722 = vmatmul.mubr.f32.gmra.mrb[0].mxu0 %v299
    %v723 = vpop.f32.mrb[0].mxu0
    %v724 = vadd.f32 %v624, %v723
    %v725 = vpop.f32.mrb[0].mxu0
    %726 = vmatprep.mubr.f32.mxu0 %v307
    %727 = vmatmul.mubr.f32.gmra.mrb[0].mxu0 %v306
    %v728 = vpop.f32.mrb[0].mxu0
    %v729 = vadd.f32 %v629, %v728
    %v730 = vpop.f32.mrb[0].mxu0
    %731 = vmatprep.mubr.f32.mxu0 %v314
    %732 = vmatmul.mubr.f32.gmra.mrb[0].mxu0 %v313
    %v733 = vpop.f32.mrb[0].mxu0
    %v734 = vadd.f32 %v634, %v733
    %v735 = vpop.f32.mrb[0].mxu0
    %736 = vmatprep.mubr.f32.mxu0 %v321
    %737 = vmatmul.mubr.f32.gmra.mrb[0].mxu0 %v320
    %v738 = vpop.f32.mrb[0].mxu0
    %v739 = vadd.f32 %v639, %v738
    %v740 = vpop.f32.mrb[0].mxu0
    %741 = vdwg.mxu0
    %742 = vmatprep.subr.mxu0 0.0
    %743 = vmatpush1.msra.mxu0 %v419
    %744 = vmatprep.subr.mxu0 0.0
    %745 = vmatpush1.msra.mxu0 0.0
    %746 = vmatprep.subr.mxu0 0.0
    %747 = vmatpush1.msra.mxu0 0.0
    %748 = vmatprep.subr.mxu0 0.0
    %749 = vmatpush1.msra.mxu0 0.0
    %750 = vmatprep.subr.mxu0 0.0
    %751 = vmatpush1.msra.mxu0 0.0
    %752 = vmatprep.subr.mxu0 0.0
    %753 = vmatpush1.msra.mxu0 0.0
    %754 = vmatprep.subr.mxu0 0.0
    %755 = vmatpush1.msra.mxu0 0.0
    %756 = vmatprep.subr.mxu0 0.0
    %757 = vmatpush1.msra.mxu0 0.0
    %758 = vmatprep.subr.mxu0 0.0
    %759 = vmatpush1.msra.mxu0 0.0
    %760 = vmatprep.subr.mxu0 0.0
    %761 = vmatpush1.msra.mxu0 0.0
    %762 = vmatprep.subr.mxu0 0.0
    %763 = vmatpush1.msra.mxu0 0.0
    %764 = vmatprep.subr.mxu0 0.0
    %765 = vmatpush1.msra.mxu0 0.0
    %766 = vmatprep.subr.mxu0 0.0
    %767 = vmatpush1.msra.mxu0 0.0
    %768 = vmatprep.subr.mxu0 0.0
    %769 = vmatpush1.msra.mxu0 0.0
    %770 = vmatprep.subr.mxu0 0.0
    %771 = vmatpush1.msra.mxu0 0.0
    %772 = vmatprep.subr.mxu0 0.0
    %773 = vmatpush1.msra.mxu0 0.0
    %774 = vmatprep.subr.mxu0 0.0
    %775 = vmatpush1.msra.mxu0 0.0
    %776 = vmatprep.subr.mxu0 0.0
    %777 = vmatpush1.msra.mxu0 0.0
    %778 = vmatprep.subr.mxu0 0.0
    %779 = vmatpush1.msra.mxu0 0.0
    %780 = vmatprep.subr.mxu0 0.0
    %781 = vmatpush1.msra.mxu0 0.0
    %782 = vmatprep.subr.mxu0 0.0
    %783 = vmatpush1.msra.mxu0 0.0
    %784 = vmatprep.subr.mxu0 0.0
    %785 = vmatpush1.msra.mxu0 0.0
    %786 = vmatprep.subr.mxu0 0.0
    %787 = vmatpush1.msra.mxu0 0.0
    %788 = vmatprep.subr.mxu0 0.0
    %789 = vmatpush1.msra.mxu0 0.0
    %790 = vmatprep.subr.mxu0 0.0
    %791 = vmatpush1.msra.mxu0 0.0
    %792 = vmatprep.subr.mxu0 0.0
    %793 = vmatpush1.msra.mxu0 0.0
    %794 = vmatprep.subr.mxu0 0.0
    %795 = vmatpush1.msra.mxu0 0.0
    %796 = vmatprep.subr.mxu0 0.0
    %797 = vmatpush1.msra.mxu0 0.0
    %798 = vmatprep.subr.mxu0 0.0
    %799 = vmatpush1.msra.mxu0 0.0
    %800 = vmatprep.subr.mxu0 0.0
    %801 = vmatpush1.msra.mxu0 0.0
    %802 = vmatprep.subr.mxu0 0.0
    %803 = vmatpush1.msra.mxu0 0.0
    %804 = vmatprep.subr.mxu0 0.0
    %805 = vmatpush1.msra.mxu0 0.0
    %806 = vmatprep.mubr.f32.mxu0 0.0
    %807 = vmatmul.mubr.f32.gmra.mrb[0].mxu0 %v422
    %v808 = vpop.f32.mrb[0].mxu0
    %v809 = vadd.f32 %v709, %v808
    %v810 = vpop.f32.mrb[0].mxu0
    %811 = vmatprep.mubr.f32.mxu0 0.0
    %812 = vmatmul.mubr.f32.gmra.mrb[0].mxu0 %v425
    %v813 = vpop.f32.mrb[0].mxu0
    %v814 = vadd.f32 %v714, %v813
    %v815 = vpop.f32.mrb[0].mxu0
    %816 = vmatprep.mubr.f32.mxu0 0.0
    %817 = vmatmul.mubr.f32.gmra.mrb[0].mxu0 %v428
    %v818 = vpop.f32.mrb[0].mxu0
    %v819 = vadd.f32 %v719, %v818
    %v820 = vpop.f32.mrb[0].mxu0
    %821 = vmatprep.mubr.f32.mxu0 0.0
    %822 = vmatmul.mubr.f32.gmra.mrb[0].mxu0 %v431
    %v823 = vpop.f32.mrb[0].mxu0
    %v824 = vadd.f32 %v724, %v823
    %v825 = vpop.f32.mrb[0].mxu0
    %826 = vmatprep.mubr.f32.mxu0 0.0
    %827 = vmatmul.mubr.f32.gmra.mrb[0].mxu0 %v434
    %v828 = vpop.f32.mrb[0].mxu0
    %v829 = vadd.f32 %v729, %v828
    %v830 = vpop.f32.mrb[0].mxu0
    %831 = vmatprep.mubr.f32.mxu0 0.0
    %832 = vmatmul.mubr.f32.gmra.mrb[0].mxu0 %v437
    %v833 = vpop.f32.mrb[0].mxu0
    %v834 = vadd.f32 %v734, %v833
    %v835 = vpop.f32.mrb[0].mxu0
    %836 = vmatprep.mubr.f32.mxu0 0.0
    %837 = vmatmul.mubr.f32.gmra.mrb[0].mxu0 %v440
    %v838 = vpop.f32.mrb[0].mxu0
    %v839 = vadd.f32 %v739, %v838
    %v840 = vpop.f32.mrb[0].mxu0
    %841 = vdwg.mxu0
    %v842 = vld [vmem:[%s2] sm:$0xf]
    %v843 = vld [vmem:[%s2 + $0x4] sm:$0xf]
    %v844 = vld [vmem:[%s2 + $0x8] sm:$0xf]
    %v845 = vld [vmem:[%s2 + $0xc] sm:$0xf]
    %v846 = vld [vmem:[%s2 + $0x10] sm:$0xf]
    %v847 = vld [vmem:[%s2 + $0x14] sm:$0xf]
    %v848 = vld [vmem:[%s2 + $0x18] sm:$0xf]
    %v849 = vpack.c.bf16 %v814, %v809
    %v850 = vpack.c.bf16 %v824, %v819
    %v851 = vpack.c.bf16 %v834, %v829
    %v852 = vpack.c.bf16 %v839, %v839
    %v860 = vunpack.c.l.b16 %v842
    %v861 = vunpack.c.l.b16 %v843
    %v862 = vunpack.c.l.b16 %v844
    %v863 = vunpack.c.l.b16 %v845
    %v864 = vunpack.c.l.b16 %v846
    %v865 = vunpack.c.l.b16 %v847
    %v866 = vunpack.c.l.b16 %v848
    %v867 = vpack.c.b16 %v861, %v860
    %v868 = vpack.c.b16 %v863, %v862
    %v869 = vpack.c.b16 %v865, %v864
    %v870 = vpack.c.b16 %v866, %v866
    %vm871 = vcmask 457728
    %v873 = vsel %vm871, %v867, 0
    %v876 = vsel %vm871, %v868, 0
    %v879 = vsel %vm871, %v869, 0
    %v882 = vsel %vm871, %v870, 0
    %vm884 = vcmask 1043456
    %v886 = vsel %vm884, %v852, 0
    %888 = vmatprep.subr.bf16.mxu0 0
    %889 = vmatpush1.bf16.msra.mxu0 %v849
    %890 = vmatprep.subr.bf16.mxu0 0
    %891 = vmatpush1.bf16.msra.mxu0 %v850
    %892 = vmatprep.subr.bf16.mxu0 0
    %893 = vmatpush1.bf16.msra.mxu0 %v851
    %894 = vmatprep.subr.bf16.mxu0 0
    %895 = vmatpush1.bf16.msra.mxu0 %v886
    %896 = vmatprep.subr.bf16.mxu0 0
    %897 = vmatpush1.bf16.msra.mxu0 0
    %898 = vmatprep.subr.bf16.mxu0 0
    %899 = vmatpush1.bf16.msra.mxu0 0
    %900 = vmatprep.subr.bf16.mxu0 0
    %901 = vmatpush1.bf16.msra.mxu0 0
    %902 = vmatprep.subr.bf16.mxu0 0
    %903 = vmatpush1.bf16.msra.mxu0 0
    %904 = vmatprep.subr.bf16.mxu0 0
    %905 = vmatpush1.bf16.msra.mxu0 0
    %906 = vmatprep.subr.bf16.mxu0 0
    %907 = vmatpush1.bf16.msra.mxu0 0
    %908 = vmatprep.subr.bf16.mxu0 0
    %909 = vmatpush1.bf16.msra.mxu0 0
    %910 = vmatprep.subr.bf16.mxu0 0
    %911 = vmatpush1.bf16.msra.mxu0 0
    %912 = vmatprep.subr.bf16.mxu0 0
    %913 = vmatpush1.bf16.msra.mxu0 0
    %914 = vmatprep.subr.bf16.mxu0 0
    %915 = vmatpush1.bf16.msra.mxu0 0
    %916 = vmatprep.subr.bf16.mxu0 0
    %917 = vmatpush1.bf16.msra.mxu0 0
    %918 = vmatprep.subr.bf16.mxu0 0
    %919 = vmatpush1.bf16.msra.mxu0 0
    %920 = vmatprep.mubr.bf16.mxu0 0
    %921 = vmatmul.mubr.bf16.gmra.mrb[0].mxu0 %v873
    %v922 = vpop.f32.mrb[0].mxu0
    %v923 = vadd.f32 0.0, %v922
    %v924 = vpop.f32.mrb[0].mxu0
    %v925 = vpop.f32.mrb[0].mxu0
    %v926 = vadd.f32 0.0, %v925
    %v927 = vpop.f32.mrb[0].mxu0
    %928 = vmatprep.mubr.bf16.mxu0 0
    %929 = vmatmul.mubr.bf16.gmra.mrb[0].mxu0 %v876
    %v930 = vpop.f32.mrb[0].mxu0
    %v931 = vadd.f32 0.0, %v930
    %v932 = vpop.f32.mrb[0].mxu0
    %v933 = vpop.f32.mrb[0].mxu0
    %v934 = vadd.f32 0.0, %v933
    %v935 = vpop.f32.mrb[0].mxu0
    %936 = vmatprep.mubr.bf16.mxu0 0
    %937 = vmatmul.mubr.bf16.gmra.mrb[0].mxu0 %v879
    %v938 = vpop.f32.mrb[0].mxu0
    %v939 = vadd.f32 0.0, %v938
    %v940 = vpop.f32.mrb[0].mxu0
    %v941 = vpop.f32.mrb[0].mxu0
    %v942 = vadd.f32 0.0, %v941
    %v943 = vpop.f32.mrb[0].mxu0
    %944 = vmatprep.mubr.bf16.mxu0 0
    %945 = vmatmul.mubr.bf16.gmra.mrb[0].mxu0 %v882
    %v946 = vpop.f32.mrb[0].mxu0
    %v947 = vadd.f32 0.0, %v946
    %v948 = vpop.f32.mrb[0].mxu0
    %v949 = vpop.f32.mrb[0].mxu0
    %v950 = vpop.f32.mrb[0].mxu0
    %951 = vdwg.mxu0
    %v952 = vpack.c.bf16 %v926, %v923
    %v953 = vpack.c.bf16 %v934, %v931
    %v954 = vpack.c.bf16 %v942, %v939
    %v955 = vpack.c.bf16 %v947, %v947
    %960 = vrot.lane.b32.xlu0 %v952, 32
    %v961 = vpop.permute.xlu0 %960
    %962 = vrot.lane.b32.xlu0 %v953, 32
    %v963 = vpop.permute.xlu0 %962
    %964 = vrot.lane.b32.xlu0 %v954, 32
    %v965 = vpop.permute.xlu0 %964
    %966 = vrot.lane.b32.xlu0 %v955, 32
    %v967 = vpop.permute.xlu0 %966
    %vm968 = vcmask 261120
    %v971 = vsel %vm968, %v849, %v961
    %v974 = vsel %vm968, %v850, %v963
    %v977 = vsel %vm968, %v851, %v965
    %v979 = vsel %vm968, %v852, %v967
    %v980 = vld [vmem:[%s3] sm:$0xf]
    %v981 = vld [vmem:[%s3 + $0x4] sm:$0xf]
    %v982 = vld [vmem:[%s3 + $0x8] sm:$0xf]
    %v983 = vld [vmem:[%s3 + $0xc] sm:$0xf]
    %v984 = vld [vmem:[%s3 + $0x10] sm:$0xf]
    %v985 = vld [vmem:[%s3 + $0x14] sm:$0xf]
    %v986 = vld [vmem:[%s3 + $0x18] sm:$0xf]
    %v987 = vld [vmem:[%s3 + $0x1c] sm:$0xf]
    %v988 = vld [vmem:[%s4] sm:$0xf]
    %v989 = vlaneseq
    %v990 = vshrl.u32 %v989, 7
    %v991 = vsub.s32 0, %v990
    %v992 = vrot.slane %v988, %v991
    %v1001 = vunpack.c.l.b16 %v980
    %v1002 = vunpack.c.l.b16 %v981
    %v1003 = vunpack.c.l.b16 %v982
    %v1004 = vunpack.c.l.b16 %v983
    %v1005 = vunpack.c.l.b16 %v984
    %v1006 = vunpack.c.l.b16 %v985
    %v1007 = vunpack.c.l.b16 %v986
    %v1008 = vunpack.c.l.b16 %v987
    %v1009 = vpack.c.b16 %v1002, %v1001
    %v1010 = vpack.c.b16 %v1004, %v1003
    %v1011 = vpack.c.b16 %v1006, %v1005
    %v1012 = vpack.c.b16 %v1008, %v1007
    %vm1017 = vcmask 523264
    %v1018 = vsel %vm1017, %v971, 0
    %v1020 = vsel %vm1017, %v974, 0
    %v1022 = vsel %vm1017, %v977, 0
    %v1024 = vsel %vm1017, %v979, 0
    %1026 = vmatprep.subr.bf16.mxu0 0
    %1027 = vmatpush1.bf16.msra.mxu0 %v1009
    %1028 = vmatprep.subr.bf16.mxu0 0
    %1029 = vmatpush1.bf16.msra.mxu0 %v1010
    %1030 = vmatprep.subr.bf16.mxu0 0
    %1031 = vmatpush1.bf16.msra.mxu0 %v1011
    %1032 = vmatprep.subr.bf16.mxu0 0
    %1033 = vmatpush1.bf16.msra.mxu0 %v1012
    %1034 = vmatprep.subr.bf16.mxu0 0
    %1035 = vmatpush1.bf16.msra.mxu0 0
    %1036 = vmatprep.subr.bf16.mxu0 0
    %1037 = vmatpush1.bf16.msra.mxu0 0
    %1038 = vmatprep.subr.bf16.mxu0 0
    %1039 = vmatpush1.bf16.msra.mxu0 0
    %1040 = vmatprep.subr.bf16.mxu0 0
    %1041 = vmatpush1.bf16.msra.mxu0 0
    %1042 = vmatprep.subr.bf16.mxu0 0
    %1043 = vmatpush1.bf16.msra.mxu0 0
    %1044 = vmatprep.subr.bf16.mxu0 0
    %1045 = vmatpush1.bf16.msra.mxu0 0
    %1046 = vmatprep.subr.bf16.mxu0 0
    %1047 = vmatpush1.bf16.msra.mxu0 0
    %1048 = vmatprep.subr.bf16.mxu0 0
    %1049 = vmatpush1.bf16.msra.mxu0 0
    %1050 = vmatprep.subr.bf16.mxu0 0
    %1051 = vmatpush1.bf16.msra.mxu0 0
    %1052 = vmatprep.subr.bf16.mxu0 0
    %1053 = vmatpush1.bf16.msra.mxu0 0
    %1054 = vmatprep.subr.bf16.mxu0 0
    %1055 = vmatpush1.bf16.msra.mxu0 0
    %1056 = vmatprep.subr.bf16.mxu0 0
    %1057 = vmatpush1.bf16.msra.mxu0 0
    %1058 = vmatprep.mubr.bf16.mxu0 0
    %1059 = vmatmul.mubr.bf16.gmra.mrb[0].mxu0 %v1018
    %v1060 = vpop.f32.mrb[0].mxu0
    %v1061 = vadd.f32 %v992, %v1060
    %v1062 = vpop.f32.mrb[0].mxu0
    %v1063 = vpop.f32.mrb[0].mxu0
    %v1064 = vadd.f32 %v992, %v1063
    %v1065 = vpop.f32.mrb[0].mxu0
    %1066 = vmatprep.mubr.bf16.mxu0 0
    %1067 = vmatmul.mubr.bf16.gmra.mrb[0].mxu0 %v1020
    %v1068 = vpop.f32.mrb[0].mxu0
    %v1069 = vadd.f32 %v992, %v1068
    %v1070 = vpop.f32.mrb[0].mxu0
    %v1071 = vpop.f32.mrb[0].mxu0
    %v1072 = vadd.f32 %v992, %v1071
    %v1073 = vpop.f32.mrb[0].mxu0
    %1074 = vmatprep.mubr.bf16.mxu0 0
    %1075 = vmatmul.mubr.bf16.gmra.mrb[0].mxu0 %v1022
    %v1076 = vpop.f32.mrb[0].mxu0
    %v1077 = vadd.f32 %v992, %v1076
    %v1078 = vpop.f32.mrb[0].mxu0
    %v1079 = vpop.f32.mrb[0].mxu0
    %v1080 = vadd.f32 %v992, %v1079
    %v1081 = vpop.f32.mrb[0].mxu0
    %1082 = vmatprep.mubr.bf16.mxu0 0
    %1083 = vmatmul.mubr.bf16.gmra.mrb[0].mxu0 %v1024
    %v1084 = vpop.f32.mrb[0].mxu0
    %v1085 = vadd.f32 %v992, %v1084
    %v1086 = vpop.f32.mrb[0].mxu0
    %v1087 = vpop.f32.mrb[0].mxu0
    %v1088 = vpop.f32.mrb[0].mxu0
    %1089 = vdwg.mxu0
    %vm1090 = vcmp.gt.f32.partialorder %v1061, 0.0
    %vm1091 = vcmp.gt.f32.partialorder %v1064, 0.0
    %vm1092 = vcmp.gt.f32.partialorder %v1069, 0.0
    %vm1093 = vcmp.gt.f32.partialorder %v1072, 0.0
    %vm1094 = vcmp.gt.f32.partialorder %v1077, 0.0
    %vm1095 = vcmp.gt.f32.partialorder %v1080, 0.0
    %vm1096 = vcmp.gt.f32.partialorder %v1085, 0.0
    %v1097 = vlaneseq
    %v1098 = vshrl.u32 %v1097, 7
    %v1099 = vsub.s32 1, %v1098
    %v1100 = vrot.slane %v988, %v1099
    %v1101 = vmul.f32 %v1100, %v1061
    %v1102 = vmul.f32 %v1100, %v1064
    %v1103 = vmul.f32 %v1100, %v1069
    %v1104 = vmul.f32 %v1100, %v1072
    %v1105 = vmul.f32 %v1100, %v1077
    %v1106 = vmul.f32 %v1100, %v1080
    %v1107 = vmul.f32 %v1100, %v1085
    %v1108 = vsel %vm1090, %v1061, %v1101
    %v1109 = vsel %vm1091, %v1064, %v1102
    %v1110 = vsel %vm1092, %v1069, %v1103
    %v1111 = vsel %vm1093, %v1072, %v1104
    %v1112 = vsel %vm1094, %v1077, %v1105
    %v1113 = vsel %vm1095, %v1080, %v1106
    %v1114 = vsel %vm1096, %v1085, %v1107
    %v1115 = vlaneseq
    %v1116 = vshrl.u32 %v1115, 7
    %v1117 = vsub.s32 2, %v1116
    %v1118 = vrot.slane %v988, %v1117
    %v1119 = vmul.f32 %v1108, %v1118
    %v1120 = vmul.f32 %v1109, %v1118
    %v1121 = vmul.f32 %v1110, %v1118
    %v1122 = vmul.f32 %v1111, %v1118
    %v1123 = vmul.f32 %v1112, %v1118
    %v1124 = vmul.f32 %v1113, %v1118
    %v1125 = vmul.f32 %v1114, %v1118
    %v1126 = vlaneseq
    %v1127 = vshrl.u32 %v1126, 7
    %v1128 = vsub.s32 3, %v1127
    %v1129 = vrot.slane %v988, %v1128
    %v1130 = vadd.f32 %v1119, %v1129
    %v1131 = vadd.f32 %v1120, %v1129
    %v1132 = vadd.f32 %v1121, %v1129
    %v1133 = vadd.f32 %v1122, %v1129
    %v1134 = vadd.f32 %v1123, %v1129
    %v1135 = vadd.f32 %v1124, %v1129
    %v1136 = vadd.f32 %v1125, %v1129
    %v1137 = vsel %vm70, 1, 0
    %v1138 = vsel %vm71, 1, 0
    %v1139 = vsel %vm72, 1, 0
    %v1140 = vsel %vm73, 1, 0
    %v1141 = vsel %vm74, 1, 0
    %v1142 = vsel %vm75, 1, 0
    %v1143 = vsel %vm76, 1, 0
    %vm1144 = vcmp.eq.s32.totalorder %v1137, 1
    %vm1145 = vcmp.eq.s32.totalorder %v1138, 1
    %vm1146 = vcmp.eq.s32.totalorder %v1139, 1
    %vm1147 = vcmp.eq.s32.totalorder %v1140, 1
    %vm1148 = vcmp.eq.s32.totalorder %v1141, 1
    %vm1149 = vcmp.eq.s32.totalorder %v1142, 1
    %vm1150 = vcmp.eq.s32.totalorder %v1143, 1
    %1158 = vrot.lane.b32.xlu0 %v1130, 96
    %v1159 = vpop.permute.xlu0 %1158
    %1160 = vrot.lane.b32.xlu0 %v1131, 96
    %v1161 = vpop.permute.xlu0 %1160
    %1162 = vrot.lane.b32.xlu0 %v1132, 96
    %v1163 = vpop.permute.xlu0 %1162
    %1164 = vrot.lane.b32.xlu0 %v1133, 96
    %v1165 = vpop.permute.xlu0 %1164
    %1166 = vrot.lane.b32.xlu0 %v1134, 96
    %v1167 = vpop.permute.xlu0 %1166
    %1168 = vrot.lane.b32.xlu0 %v1135, 96
    %v1169 = vpop.permute.xlu0 %1168
    %1170 = vrot.lane.b32.xlu0 %v1136, 96
    %v1171 = vpop.permute.xlu0 %1170
    %v1179 = vsel %vm1144, %v1130, %v1159
    %v1180 = vsel %vm1145, %v1131, %v1161
    %v1181 = vsel %vm1146, %v1132, %v1163
    %v1182 = vsel %vm1147, %v1133, %v1165
    %v1183 = vsel %vm1148, %v1134, %v1167
    %v1184 = vsel %vm1149, %v1135, %v1169
    %v1185 = vsel %vm1150, %v1136, %v1171
    %v1186 = vsel %vm49, 1, 0
    %v1187 = vsel %vm50, 1, 0
    %v1188 = vsel %vm51, 1, 0
    %v1189 = vsel %vm52, 1, 0
    %v1190 = vsel %vm53, 1, 0
    %v1191 = vsel %vm54, 1, 0
    %v1192 = vsel %vm55, 1, 0
    %vm1193 = vcmp.eq.s32.totalorder %v1186, 1
    %vm1194 = vcmp.eq.s32.totalorder %v1187, 1
    %vm1195 = vcmp.eq.s32.totalorder %v1188, 1
    %vm1196 = vcmp.eq.s32.totalorder %v1189, 1
    %vm1197 = vcmp.eq.s32.totalorder %v1190, 1
    %vm1198 = vcmp.eq.s32.totalorder %v1191, 1
    %vm1199 = vcmp.eq.s32.totalorder %v1192, 1
    %1207 = vrot.lane.b32.xlu0 %v1179, 96
    %v1208 = vpop.permute.xlu0 %1207
    %1209 = vrot.lane.b32.xlu0 %v1180, 96
    %v1210 = vpop.permute.xlu0 %1209
    %1211 = vrot.lane.b32.xlu0 %v1181, 96
    %v1212 = vpop.permute.xlu0 %1211
    %1213 = vrot.lane.b32.xlu0 %v1182, 96
    %v1214 = vpop.permute.xlu0 %1213
    %1215 = vrot.lane.b32.xlu0 %v1183, 96
    %v1216 = vpop.permute.xlu0 %1215
    %1217 = vrot.lane.b32.xlu0 %v1184, 96
    %v1218 = vpop.permute.xlu0 %1217
    %1219 = vrot.lane.b32.xlu0 %v1185, 96
    %v1220 = vpop.permute.xlu0 %1219
    %v1228 = vsel %vm1193, %v1130, %v1208
    %v1229 = vsel %vm1194, %v1131, %v1210
    %v1230 = vsel %vm1195, %v1132, %v1212
    %v1231 = vsel %vm1196, %v1133, %v1214
    %v1232 = vsel %vm1197, %v1134, %v1216
    %v1233 = vsel %vm1198, %v1135, %v1218
    %v1234 = vsel %vm1199, %v1136, %v1220
    %v1235 = vpack.c.bf16 %v1229, %v1228
    %v1236 = vpack.c.bf16 %v1231, %v1230
    %v1237 = vpack.c.bf16 %v1233, %v1232
    %v1238 = vpack.c.bf16 %v1234, %v1234
    %v1240 = vsel %vm884, %v1238, 0
    %1242 = vmatprep.subr.bf16.mxu0 0
    %1243 = vmatpush1.bf16.msra.mxu0 %v1235
    %1244 = vmatprep.subr.bf16.mxu0 0
    %1245 = vmatpush1.bf16.msra.mxu0 %v1236
    %1246 = vmatprep.subr.bf16.mxu0 0
    %1247 = vmatpush1.bf16.msra.mxu0 %v1237
    %1248 = vmatprep.subr.bf16.mxu0 0
    %1249 = vmatpush1.bf16.msra.mxu0 %v1240
    %1250 = vmatprep.subr.bf16.mxu0 0
    %1251 = vmatpush1.bf16.msra.mxu0 0
    %1252 = vmatprep.subr.bf16.mxu0 0
    %1253 = vmatpush1.bf16.msra.mxu0 0
    %1254 = vmatprep.subr.bf16.mxu0 0
    %1255 = vmatpush1.bf16.msra.mxu0 0
    %1256 = vmatprep.subr.bf16.mxu0 0
    %1257 = vmatpush1.bf16.msra.mxu0 0
    %1258 = vmatprep.subr.bf16.mxu0 0
    %1259 = vmatpush1.bf16.msra.mxu0 0
    %1260 = vmatprep.subr.bf16.mxu0 0
    %1261 = vmatpush1.bf16.msra.mxu0 0
    %1262 = vmatprep.subr.bf16.mxu0 0
    %1263 = vmatpush1.bf16.msra.mxu0 0
    %1264 = vmatprep.subr.bf16.mxu0 0
    %1265 = vmatpush1.bf16.msra.mxu0 0
    %1266 = vmatprep.subr.bf16.mxu0 0
    %1267 = vmatpush1.bf16.msra.mxu0 0
    %1268 = vmatprep.subr.bf16.mxu0 0
    %1269 = vmatpush1.bf16.msra.mxu0 0
    %1270 = vmatprep.subr.bf16.mxu0 0
    %1271 = vmatpush1.bf16.msra.mxu0 0
    %1272 = vmatprep.subr.bf16.mxu0 0
    %1273 = vmatpush1.bf16.msra.mxu0 0
    %1274 = vmatprep.mubr.bf16.mxu0 0
    %1275 = vmatmul.mubr.bf16.gmra.mrb[0].mxu0 %v873
    %v1276 = vpop.f32.mrb[0].mxu0
    %v1277 = vadd.f32 0.0, %v1276
    %v1278 = vpop.f32.mrb[0].mxu0
    %v1279 = vpop.f32.mrb[0].mxu0
    %v1280 = vadd.f32 0.0, %v1279
    %v1281 = vpop.f32.mrb[0].mxu0
    %1282 = vmatprep.mubr.bf16.mxu0 0
    %1283 = vmatmul.mubr.bf16.gmra.mrb[0].mxu0 %v876
    %v1284 = vpop.f32.mrb[0].mxu0
    %v1285 = vadd.f32 0.0, %v1284
    %v1286 = vpop.f32.mrb[0].mxu0
    %v1287 = vpop.f32.mrb[0].mxu0
    %v1288 = vadd.f32 0.0, %v1287
    %v1289 = vpop.f32.mrb[0].mxu0
    %1290 = vmatprep.mubr.bf16.mxu0 0
    %1291 = vmatmul.mubr.bf16.gmra.mrb[0].mxu0 %v879
    %v1292 = vpop.f32.mrb[0].mxu0
    %v1293 = vadd.f32 0.0, %v1292
    %v1294 = vpop.f32.mrb[0].mxu0
    %v1295 = vpop.f32.mrb[0].mxu0
    %v1296 = vadd.f32 0.0, %v1295
    %v1297 = vpop.f32.mrb[0].mxu0
    %1298 = vmatprep.mubr.bf16.mxu0 0
    %1299 = vmatmul.mubr.bf16.gmra.mrb[0].mxu0 %v882
    %v1300 = vpop.f32.mrb[0].mxu0
    %v1301 = vadd.f32 0.0, %v1300
    %v1302 = vpop.f32.mrb[0].mxu0
    %v1303 = vpop.f32.mrb[0].mxu0
    %v1304 = vpop.f32.mrb[0].mxu0
    %1305 = vdwg.mxu0
    %v1306 = vpack.c.bf16 %v1280, %v1277
    %v1307 = vpack.c.bf16 %v1288, %v1285
    %v1308 = vpack.c.bf16 %v1296, %v1293
    %v1309 = vpack.c.bf16 %v1301, %v1301
    %1314 = vrot.lane.b32.xlu0 %v1306, 32
    %v1315 = vpop.permute.xlu0 %1314
    %1316 = vrot.lane.b32.xlu0 %v1307, 32
    %v1317 = vpop.permute.xlu0 %1316
    %1318 = vrot.lane.b32.xlu0 %v1308, 32
    %v1319 = vpop.permute.xlu0 %1318
    %1320 = vrot.lane.b32.xlu0 %v1309, 32
    %v1321 = vpop.permute.xlu0 %1320
    %v1324 = vsel %vm968, %v1235, %v1315
    %v1327 = vsel %vm968, %v1236, %v1317
    %v1330 = vsel %vm968, %v1237, %v1319
    %v1332 = vsel %vm968, %v1238, %v1321
    %s1333 = scalar_lea.vmem %s3, 32
    %v1334 = vld [vmem:[%s1333] sm:$0xf]
    %v1335 = vld [vmem:[%s1333 + $0x4] sm:$0xf]
    %v1336 = vld [vmem:[%s1333 + $0x8] sm:$0xf]
    %v1337 = vld [vmem:[%s1333 + $0xc] sm:$0xf]
    %v1338 = vld [vmem:[%s1333 + $0x10] sm:$0xf]
    %v1339 = vld [vmem:[%s1333 + $0x14] sm:$0xf]
    %v1340 = vld [vmem:[%s1333 + $0x18] sm:$0xf]
    %v1341 = vld [vmem:[%s1333 + $0x1c] sm:$0xf]
    %s1342 = scalar_lea.vmem %s4, 4
    %v1343 = vld [vmem:[%s1342] sm:$0xf]
    %v1344 = vlaneseq
    %v1345 = vshrl.u32 %v1344, 7
    %v1346 = vsub.s32 0, %v1345
    %v1347 = vrot.slane %v1343, %v1346
    %v1356 = vunpack.c.l.b16 %v1334
    %v1357 = vunpack.c.l.b16 %v1335
    %v1358 = vunpack.c.l.b16 %v1336
    %v1359 = vunpack.c.l.b16 %v1337
    %v1360 = vunpack.c.l.b16 %v1338
    %v1361 = vunpack.c.l.b16 %v1339
    %v1362 = vunpack.c.l.b16 %v1340
    %v1363 = vunpack.c.l.b16 %v1341
    %v1364 = vpack.c.b16 %v1357, %v1356
    %v1365 = vpack.c.b16 %v1359, %v1358
    %v1366 = vpack.c.b16 %v1361, %v1360
    %v1367 = vpack.c.b16 %v1363, %v1362
    %v1372 = vsel %vm1017, %v1324, 0
    %v1374 = vsel %vm1017, %v1327, 0
    %v1376 = vsel %vm1017, %v1330, 0
    %v1378 = vsel %vm1017, %v1332, 0
    %1380 = vmatprep.subr.bf16.mxu0 0
    %1381 = vmatpush1.bf16.msra.mxu0 %v1364
    %1382 = vmatprep.subr.bf16.mxu0 0
    %1383 = vmatpush1.bf16.msra.mxu0 %v1365
    %1384 = vmatprep.subr.bf16.mxu0 0
    %1385 = vmatpush1.bf16.msra.mxu0 %v1366
    %1386 = vmatprep.subr.bf16.mxu0 0
    %1387 = vmatpush1.bf16.msra.mxu0 %v1367
    %1388 = vmatprep.subr.bf16.mxu0 0
    %1389 = vmatpush1.bf16.msra.mxu0 0
    %1390 = vmatprep.subr.bf16.mxu0 0
    %1391 = vmatpush1.bf16.msra.mxu0 0
    %1392 = vmatprep.subr.bf16.mxu0 0
    %1393 = vmatpush1.bf16.msra.mxu0 0
    %1394 = vmatprep.subr.bf16.mxu0 0
    %1395 = vmatpush1.bf16.msra.mxu0 0
    %1396 = vmatprep.subr.bf16.mxu0 0
    %1397 = vmatpush1.bf16.msra.mxu0 0
    %1398 = vmatprep.subr.bf16.mxu0 0
    %1399 = vmatpush1.bf16.msra.mxu0 0
    %1400 = vmatprep.subr.bf16.mxu0 0
    %1401 = vmatpush1.bf16.msra.mxu0 0
    %1402 = vmatprep.subr.bf16.mxu0 0
    %1403 = vmatpush1.bf16.msra.mxu0 0
    %1404 = vmatprep.subr.bf16.mxu0 0
    %1405 = vmatpush1.bf16.msra.mxu0 0
    %1406 = vmatprep.subr.bf16.mxu0 0
    %1407 = vmatpush1.bf16.msra.mxu0 0
    %1408 = vmatprep.subr.bf16.mxu0 0
    %1409 = vmatpush1.bf16.msra.mxu0 0
    %1410 = vmatprep.subr.bf16.mxu0 0
    %1411 = vmatpush1.bf16.msra.mxu0 0
    %1412 = vmatprep.mubr.bf16.mxu0 0
    %1413 = vmatmul.mubr.bf16.gmra.mrb[0].mxu0 %v1372
    %v1414 = vpop.f32.mrb[0].mxu0
    %v1415 = vadd.f32 %v1347, %v1414
    %v1416 = vpop.f32.mrb[0].mxu0
    %v1417 = vpop.f32.mrb[0].mxu0
    %v1418 = vadd.f32 %v1347, %v1417
    %v1419 = vpop.f32.mrb[0].mxu0
    %1420 = vmatprep.mubr.bf16.mxu0 0
    %1421 = vmatmul.mubr.bf16.gmra.mrb[0].mxu0 %v1374
    %v1422 = vpop.f32.mrb[0].mxu0
    %v1423 = vadd.f32 %v1347, %v1422
    %v1424 = vpop.f32.mrb[0].mxu0
    %v1425 = vpop.f32.mrb[0].mxu0
    %v1426 = vadd.f32 %v1347, %v1425
    %v1427 = vpop.f32.mrb[0].mxu0
    %1428 = vmatprep.mubr.bf16.mxu0 0
    %1429 = vmatmul.mubr.bf16.gmra.mrb[0].mxu0 %v1376
    %v1430 = vpop.f32.mrb[0].mxu0
    %v1431 = vadd.f32 %v1347, %v1430
    %v1432 = vpop.f32.mrb[0].mxu0
    %v1433 = vpop.f32.mrb[0].mxu0
    %v1434 = vadd.f32 %v1347, %v1433
    %v1435 = vpop.f32.mrb[0].mxu0
    %1436 = vmatprep.mubr.bf16.mxu0 0
    %1437 = vmatmul.mubr.bf16.gmra.mrb[0].mxu0 %v1378
    %v1438 = vpop.f32.mrb[0].mxu0
    %v1439 = vadd.f32 %v1347, %v1438
    %v1440 = vpop.f32.mrb[0].mxu0
    %v1441 = vpop.f32.mrb[0].mxu0
    %v1442 = vpop.f32.mrb[0].mxu0
    %1443 = vdwg.mxu0
    %vm1444 = vcmp.gt.f32.partialorder %v1415, 0.0
    %vm1445 = vcmp.gt.f32.partialorder %v1418, 0.0
    %vm1446 = vcmp.gt.f32.partialorder %v1423, 0.0
    %vm1447 = vcmp.gt.f32.partialorder %v1426, 0.0
    %vm1448 = vcmp.gt.f32.partialorder %v1431, 0.0
    %vm1449 = vcmp.gt.f32.partialorder %v1434, 0.0
    %vm1450 = vcmp.gt.f32.partialorder %v1439, 0.0
    %v1451 = vlaneseq
    %v1452 = vshrl.u32 %v1451, 7
    %v1453 = vsub.s32 1, %v1452
    %v1454 = vrot.slane %v1343, %v1453
    %v1455 = vmul.f32 %v1454, %v1415
    %v1456 = vmul.f32 %v1454, %v1418
    %v1457 = vmul.f32 %v1454, %v1423
    %v1458 = vmul.f32 %v1454, %v1426
    %v1459 = vmul.f32 %v1454, %v1431
    %v1460 = vmul.f32 %v1454, %v1434
    %v1461 = vmul.f32 %v1454, %v1439
    %v1462 = vsel %vm1444, %v1415, %v1455
    %v1463 = vsel %vm1445, %v1418, %v1456
    %v1464 = vsel %vm1446, %v1423, %v1457
    %v1465 = vsel %vm1447, %v1426, %v1458
    %v1466 = vsel %vm1448, %v1431, %v1459
    %v1467 = vsel %vm1449, %v1434, %v1460
    %v1468 = vsel %vm1450, %v1439, %v1461
    %v1469 = vlaneseq
    %v1470 = vshrl.u32 %v1469, 7
    %v1471 = vsub.s32 2, %v1470
    %v1472 = vrot.slane %v1343, %v1471
    %v1473 = vmul.f32 %v1462, %v1472
    %v1474 = vmul.f32 %v1463, %v1472
    %v1475 = vmul.f32 %v1464, %v1472
    %v1476 = vmul.f32 %v1465, %v1472
    %v1477 = vmul.f32 %v1466, %v1472
    %v1478 = vmul.f32 %v1467, %v1472
    %v1479 = vmul.f32 %v1468, %v1472
    %v1480 = vlaneseq
    %v1481 = vshrl.u32 %v1480, 7
    %v1482 = vsub.s32 3, %v1481
    %v1483 = vrot.slane %v1343, %v1482
    %v1484 = vadd.f32 %v1473, %v1483
    %v1485 = vadd.f32 %v1474, %v1483
    %v1486 = vadd.f32 %v1475, %v1483
    %v1487 = vadd.f32 %v1476, %v1483
    %v1488 = vadd.f32 %v1477, %v1483
    %v1489 = vadd.f32 %v1478, %v1483
    %v1490 = vadd.f32 %v1479, %v1483
    %1498 = vrot.lane.b32.xlu0 %v1484, 96
    %v1499 = vpop.permute.xlu0 %1498
    %1500 = vrot.lane.b32.xlu0 %v1485, 96
    %v1501 = vpop.permute.xlu0 %1500
    %1502 = vrot.lane.b32.xlu0 %v1486, 96
    %v1503 = vpop.permute.xlu0 %1502
    %1504 = vrot.lane.b32.xlu0 %v1487, 96
    %v1505 = vpop.permute.xlu0 %1504
    %1506 = vrot.lane.b32.xlu0 %v1488, 96
    %v1507 = vpop.permute.xlu0 %1506
    %1508 = vrot.lane.b32.xlu0 %v1489, 96
    %v1509 = vpop.permute.xlu0 %1508
    %1510 = vrot.lane.b32.xlu0 %v1490, 96
    %v1511 = vpop.permute.xlu0 %1510
    %v1519 = vsel %vm1144, %v1484, %v1499
    %v1520 = vsel %vm1145, %v1485, %v1501
    %v1521 = vsel %vm1146, %v1486, %v1503
    %v1522 = vsel %vm1147, %v1487, %v1505
    %v1523 = vsel %vm1148, %v1488, %v1507
    %v1524 = vsel %vm1149, %v1489, %v1509
    %v1525 = vsel %vm1150, %v1490, %v1511
    %1533 = vrot.lane.b32.xlu0 %v1519, 96
    %v1534 = vpop.permute.xlu0 %1533
    %1535 = vrot.lane.b32.xlu0 %v1520, 96
    %v1536 = vpop.permute.xlu0 %1535
    %1537 = vrot.lane.b32.xlu0 %v1521, 96
    %v1538 = vpop.permute.xlu0 %1537
    %1539 = vrot.lane.b32.xlu0 %v1522, 96
    %v1540 = vpop.permute.xlu0 %1539
    %1541 = vrot.lane.b32.xlu0 %v1523, 96
    %v1542 = vpop.permute.xlu0 %1541
    %1543 = vrot.lane.b32.xlu0 %v1524, 96
    %v1544 = vpop.permute.xlu0 %1543
    %1545 = vrot.lane.b32.xlu0 %v1525, 96
    %v1546 = vpop.permute.xlu0 %1545
    %v1554 = vsel %vm1193, %v1484, %v1534
    %v1555 = vsel %vm1194, %v1485, %v1536
    %v1556 = vsel %vm1195, %v1486, %v1538
    %v1557 = vsel %vm1196, %v1487, %v1540
    %v1558 = vsel %vm1197, %v1488, %v1542
    %v1559 = vsel %vm1198, %v1489, %v1544
    %v1560 = vsel %vm1199, %v1490, %v1546
    %v1561 = vpack.c.bf16 %v1555, %v1554
    %v1562 = vpack.c.bf16 %v1557, %v1556
    %v1563 = vpack.c.bf16 %v1559, %v1558
    %v1564 = vpack.c.bf16 %v1560, %v1560
    %v1566 = vsel %vm884, %v1564, 0
    %1568 = vmatprep.subr.bf16.mxu0 0
    %1569 = vmatpush1.bf16.msra.mxu0 %v1561
    %1570 = vmatprep.subr.bf16.mxu0 0
    %1571 = vmatpush1.bf16.msra.mxu0 %v1562
    %1572 = vmatprep.subr.bf16.mxu0 0
    %1573 = vmatpush1.bf16.msra.mxu0 %v1563
    %1574 = vmatprep.subr.bf16.mxu0 0
    %1575 = vmatpush1.bf16.msra.mxu0 %v1566
    %1576 = vmatprep.subr.bf16.mxu0 0
    %1577 = vmatpush1.bf16.msra.mxu0 0
    %1578 = vmatprep.subr.bf16.mxu0 0
    %1579 = vmatpush1.bf16.msra.mxu0 0
    %1580 = vmatprep.subr.bf16.mxu0 0
    %1581 = vmatpush1.bf16.msra.mxu0 0
    %1582 = vmatprep.subr.bf16.mxu0 0
    %1583 = vmatpush1.bf16.msra.mxu0 0
    %1584 = vmatprep.subr.bf16.mxu0 0
    %1585 = vmatpush1.bf16.msra.mxu0 0
    %1586 = vmatprep.subr.bf16.mxu0 0
    %1587 = vmatpush1.bf16.msra.mxu0 0
    %1588 = vmatprep.subr.bf16.mxu0 0
    %1589 = vmatpush1.bf16.msra.mxu0 0
    %1590 = vmatprep.subr.bf16.mxu0 0
    %1591 = vmatpush1.bf16.msra.mxu0 0
    %1592 = vmatprep.subr.bf16.mxu0 0
    %1593 = vmatpush1.bf16.msra.mxu0 0
    %1594 = vmatprep.subr.bf16.mxu0 0
    %1595 = vmatpush1.bf16.msra.mxu0 0
    %1596 = vmatprep.subr.bf16.mxu0 0
    %1597 = vmatpush1.bf16.msra.mxu0 0
    %1598 = vmatprep.subr.bf16.mxu0 0
    %1599 = vmatpush1.bf16.msra.mxu0 0
    %1600 = vmatprep.mubr.bf16.mxu0 0
    %1601 = vmatmul.mubr.bf16.gmra.mrb[0].mxu0 %v873
    %v1602 = vpop.f32.mrb[0].mxu0
    %v1603 = vadd.f32 0.0, %v1602
    %v1604 = vpop.f32.mrb[0].mxu0
    %v1605 = vpop.f32.mrb[0].mxu0
    %v1606 = vadd.f32 0.0, %v1605
    %v1607 = vpop.f32.mrb[0].mxu0
    %1608 = vmatprep.mubr.bf16.mxu0 0
    %1609 = vmatmul.mubr.bf16.gmra.mrb[0].mxu0 %v876
    %v1610 = vpop.f32.mrb[0].mxu0
    %v1611 = vadd.f32 0.0, %v1610
    %v1612 = vpop.f32.mrb[0].mxu0
    %v1613 = vpop.f32.mrb[0].mxu0
    %v1614 = vadd.f32 0.0, %v1613
    %v1615 = vpop.f32.mrb[0].mxu0
    %1616 = vmatprep.mubr.bf16.mxu0 0
    %1617 = vmatmul.mubr.bf16.gmra.mrb[0].mxu0 %v879
    %v1618 = vpop.f32.mrb[0].mxu0
    %v1619 = vadd.f32 0.0, %v1618
    %v1620 = vpop.f32.mrb[0].mxu0
    %v1621 = vpop.f32.mrb[0].mxu0
    %v1622 = vadd.f32 0.0, %v1621
    %v1623 = vpop.f32.mrb[0].mxu0
    %1624 = vmatprep.mubr.bf16.mxu0 0
    %1625 = vmatmul.mubr.bf16.gmra.mrb[0].mxu0 %v882
    %v1626 = vpop.f32.mrb[0].mxu0
    %v1627 = vadd.f32 0.0, %v1626
    %v1628 = vpop.f32.mrb[0].mxu0
    %v1629 = vpop.f32.mrb[0].mxu0
    %v1630 = vpop.f32.mrb[0].mxu0
    %1631 = vdwg.mxu0
    %v1632 = vpack.c.bf16 %v1606, %v1603
    %v1633 = vpack.c.bf16 %v1614, %v1611
    %v1634 = vpack.c.bf16 %v1622, %v1619
    %v1635 = vpack.c.bf16 %v1627, %v1627
    %1640 = vrot.lane.b32.xlu0 %v1632, 32
    %v1641 = vpop.permute.xlu0 %1640
    %1642 = vrot.lane.b32.xlu0 %v1633, 32
    %v1643 = vpop.permute.xlu0 %1642
    %1644 = vrot.lane.b32.xlu0 %v1634, 32
    %v1645 = vpop.permute.xlu0 %1644
    %1646 = vrot.lane.b32.xlu0 %v1635, 32
    %v1647 = vpop.permute.xlu0 %1646
    %v1650 = vsel %vm968, %v1561, %v1641
    %v1653 = vsel %vm968, %v1562, %v1643
    %v1656 = vsel %vm968, %v1563, %v1645
    %v1658 = vsel %vm968, %v1564, %v1647
    %s1659 = scalar_lea.vmem %s3, 64
    %v1660 = vld [vmem:[%s1659] sm:$0xf]
    %v1661 = vld [vmem:[%s1659 + $0x4] sm:$0xf]
    %v1662 = vld [vmem:[%s1659 + $0x8] sm:$0xf]
    %v1663 = vld [vmem:[%s1659 + $0xc] sm:$0xf]
    %v1664 = vld [vmem:[%s1659 + $0x10] sm:$0xf]
    %v1665 = vld [vmem:[%s1659 + $0x14] sm:$0xf]
    %v1666 = vld [vmem:[%s1659 + $0x18] sm:$0xf]
    %v1667 = vld [vmem:[%s1659 + $0x1c] sm:$0xf]
    %s1668 = scalar_lea.vmem %s4, 8
    %v1669 = vld [vmem:[%s1668] sm:$0xf]
    %v1670 = vlaneseq
    %v1671 = vshrl.u32 %v1670, 7
    %v1672 = vsub.s32 0, %v1671
    %v1673 = vrot.slane %v1669, %v1672
    %v1682 = vunpack.c.l.b16 %v1660
    %v1683 = vunpack.c.l.b16 %v1661
    %v1684 = vunpack.c.l.b16 %v1662
    %v1685 = vunpack.c.l.b16 %v1663
    %v1686 = vunpack.c.l.b16 %v1664
    %v1687 = vunpack.c.l.b16 %v1665
    %v1688 = vunpack.c.l.b16 %v1666
    %v1689 = vunpack.c.l.b16 %v1667
    %v1690 = vpack.c.b16 %v1683, %v1682
    %v1691 = vpack.c.b16 %v1685, %v1684
    %v1692 = vpack.c.b16 %v1687, %v1686
    %v1693 = vpack.c.b16 %v1689, %v1688
    %v1698 = vsel %vm1017, %v1650, 0
    %v1700 = vsel %vm1017, %v1653, 0
    %v1702 = vsel %vm1017, %v1656, 0
    %v1704 = vsel %vm1017, %v1658, 0
    %1706 = vmatprep.subr.bf16.mxu0 0
    %1707 = vmatpush1.bf16.msra.mxu0 %v1690
    %1708 = vmatprep.subr.bf16.mxu0 0
    %1709 = vmatpush1.bf16.msra.mxu0 %v1691
    %1710 = vmatprep.subr.bf16.mxu0 0
    %1711 = vmatpush1.bf16.msra.mxu0 %v1692
    %1712 = vmatprep.subr.bf16.mxu0 0
    %1713 = vmatpush1.bf16.msra.mxu0 %v1693
    %1714 = vmatprep.subr.bf16.mxu0 0
    %1715 = vmatpush1.bf16.msra.mxu0 0
    %1716 = vmatprep.subr.bf16.mxu0 0
    %1717 = vmatpush1.bf16.msra.mxu0 0
    %1718 = vmatprep.subr.bf16.mxu0 0
    %1719 = vmatpush1.bf16.msra.mxu0 0
    %1720 = vmatprep.subr.bf16.mxu0 0
    %1721 = vmatpush1.bf16.msra.mxu0 0
    %1722 = vmatprep.subr.bf16.mxu0 0
    %1723 = vmatpush1.bf16.msra.mxu0 0
    %1724 = vmatprep.subr.bf16.mxu0 0
    %1725 = vmatpush1.bf16.msra.mxu0 0
    %1726 = vmatprep.subr.bf16.mxu0 0
    %1727 = vmatpush1.bf16.msra.mxu0 0
    %1728 = vmatprep.subr.bf16.mxu0 0
    %1729 = vmatpush1.bf16.msra.mxu0 0
    %1730 = vmatprep.subr.bf16.mxu0 0
    %1731 = vmatpush1.bf16.msra.mxu0 0
    %1732 = vmatprep.subr.bf16.mxu0 0
    %1733 = vmatpush1.bf16.msra.mxu0 0
    %1734 = vmatprep.subr.bf16.mxu0 0
    %1735 = vmatpush1.bf16.msra.mxu0 0
    %1736 = vmatprep.subr.bf16.mxu0 0
    %1737 = vmatpush1.bf16.msra.mxu0 0
    %1738 = vmatprep.mubr.bf16.mxu0 0
    %1739 = vmatmul.mubr.bf16.gmra.mrb[0].mxu0 %v1698
    %v1740 = vpop.f32.mrb[0].mxu0
    %v1741 = vadd.f32 %v1673, %v1740
    %v1742 = vpop.f32.mrb[0].mxu0
    %v1743 = vpop.f32.mrb[0].mxu0
    %v1744 = vadd.f32 %v1673, %v1743
    %v1745 = vpop.f32.mrb[0].mxu0
    %1746 = vmatprep.mubr.bf16.mxu0 0
    %1747 = vmatmul.mubr.bf16.gmra.mrb[0].mxu0 %v1700
    %v1748 = vpop.f32.mrb[0].mxu0
    %v1749 = vadd.f32 %v1673, %v1748
    %v1750 = vpop.f32.mrb[0].mxu0
    %v1751 = vpop.f32.mrb[0].mxu0
    %v1752 = vadd.f32 %v1673, %v1751
    %v1753 = vpop.f32.mrb[0].mxu0
    %1754 = vmatprep.mubr.bf16.mxu0 0
    %1755 = vmatmul.mubr.bf16.gmra.mrb[0].mxu0 %v1702
    %v1756 = vpop.f32.mrb[0].mxu0
    %v1757 = vadd.f32 %v1673, %v1756
    %v1758 = vpop.f32.mrb[0].mxu0
    %v1759 = vpop.f32.mrb[0].mxu0
    %v1760 = vadd.f32 %v1673, %v1759
    %v1761 = vpop.f32.mrb[0].mxu0
    %1762 = vmatprep.mubr.bf16.mxu0 0
    %1763 = vmatmul.mubr.bf16.gmra.mrb[0].mxu0 %v1704
    %v1764 = vpop.f32.mrb[0].mxu0
    %v1765 = vadd.f32 %v1673, %v1764
    %v1766 = vpop.f32.mrb[0].mxu0
    %v1767 = vpop.f32.mrb[0].mxu0
    %v1768 = vpop.f32.mrb[0].mxu0
    %1769 = vdwg.mxu0
    %vm1770 = vcmp.gt.f32.partialorder %v1741, 0.0
    %vm1771 = vcmp.gt.f32.partialorder %v1744, 0.0
    %vm1772 = vcmp.gt.f32.partialorder %v1749, 0.0
    %vm1773 = vcmp.gt.f32.partialorder %v1752, 0.0
    %vm1774 = vcmp.gt.f32.partialorder %v1757, 0.0
    %vm1775 = vcmp.gt.f32.partialorder %v1760, 0.0
    %vm1776 = vcmp.gt.f32.partialorder %v1765, 0.0
    %v1777 = vlaneseq
    %v1778 = vshrl.u32 %v1777, 7
    %v1779 = vsub.s32 1, %v1778
    %v1780 = vrot.slane %v1669, %v1779
    %v1781 = vmul.f32 %v1780, %v1741
    %v1782 = vmul.f32 %v1780, %v1744
    %v1783 = vmul.f32 %v1780, %v1749
    %v1784 = vmul.f32 %v1780, %v1752
    %v1785 = vmul.f32 %v1780, %v1757
    %v1786 = vmul.f32 %v1780, %v1760
    %v1787 = vmul.f32 %v1780, %v1765
    %v1788 = vsel %vm1770, %v1741, %v1781
    %v1789 = vsel %vm1771, %v1744, %v1782
    %v1790 = vsel %vm1772, %v1749, %v1783
    %v1791 = vsel %vm1773, %v1752, %v1784
    %v1792 = vsel %vm1774, %v1757, %v1785
    %v1793 = vsel %vm1775, %v1760, %v1786
    %v1794 = vsel %vm1776, %v1765, %v1787
    %v1795 = vlaneseq
    %v1796 = vshrl.u32 %v1795, 7
    %v1797 = vsub.s32 2, %v1796
    %v1798 = vrot.slane %v1669, %v1797
    %v1799 = vmul.f32 %v1788, %v1798
    %v1800 = vmul.f32 %v1789, %v1798
    %v1801 = vmul.f32 %v1790, %v1798
    %v1802 = vmul.f32 %v1791, %v1798
    %v1803 = vmul.f32 %v1792, %v1798
    %v1804 = vmul.f32 %v1793, %v1798
    %v1805 = vmul.f32 %v1794, %v1798
    %v1806 = vlaneseq
    %v1807 = vshrl.u32 %v1806, 7
    %v1808 = vsub.s32 3, %v1807
    %v1809 = vrot.slane %v1669, %v1808
    %v1810 = vadd.f32 %v1799, %v1809
    %v1811 = vadd.f32 %v1800, %v1809
    %v1812 = vadd.f32 %v1801, %v1809
    %v1813 = vadd.f32 %v1802, %v1809
    %v1814 = vadd.f32 %v1803, %v1809
    %v1815 = vadd.f32 %v1804, %v1809
    %v1816 = vadd.f32 %v1805, %v1809
    %1824 = vrot.lane.b32.xlu0 %v1810, 96
    %v1825 = vpop.permute.xlu0 %1824
    %1826 = vrot.lane.b32.xlu0 %v1811, 96
    %v1827 = vpop.permute.xlu0 %1826
    %1828 = vrot.lane.b32.xlu0 %v1812, 96
    %v1829 = vpop.permute.xlu0 %1828
    %1830 = vrot.lane.b32.xlu0 %v1813, 96
    %v1831 = vpop.permute.xlu0 %1830
    %1832 = vrot.lane.b32.xlu0 %v1814, 96
    %v1833 = vpop.permute.xlu0 %1832
    %1834 = vrot.lane.b32.xlu0 %v1815, 96
    %v1835 = vpop.permute.xlu0 %1834
    %1836 = vrot.lane.b32.xlu0 %v1816, 96
    %v1837 = vpop.permute.xlu0 %1836
    %v1845 = vsel %vm1144, %v1810, %v1825
    %v1846 = vsel %vm1145, %v1811, %v1827
    %v1847 = vsel %vm1146, %v1812, %v1829
    %v1848 = vsel %vm1147, %v1813, %v1831
    %v1849 = vsel %vm1148, %v1814, %v1833
    %v1850 = vsel %vm1149, %v1815, %v1835
    %v1851 = vsel %vm1150, %v1816, %v1837
    %1859 = vrot.lane.b32.xlu0 %v1845, 96
    %v1860 = vpop.permute.xlu0 %1859
    %1861 = vrot.lane.b32.xlu0 %v1846, 96
    %v1862 = vpop.permute.xlu0 %1861
    %1863 = vrot.lane.b32.xlu0 %v1847, 96
    %v1864 = vpop.permute.xlu0 %1863
    %1865 = vrot.lane.b32.xlu0 %v1848, 96
    %v1866 = vpop.permute.xlu0 %1865
    %1867 = vrot.lane.b32.xlu0 %v1849, 96
    %v1868 = vpop.permute.xlu0 %1867
    %1869 = vrot.lane.b32.xlu0 %v1850, 96
    %v1870 = vpop.permute.xlu0 %1869
    %1871 = vrot.lane.b32.xlu0 %v1851, 96
    %v1872 = vpop.permute.xlu0 %1871
    %v1880 = vsel %vm1193, %v1810, %v1860
    %v1881 = vsel %vm1194, %v1811, %v1862
    %v1882 = vsel %vm1195, %v1812, %v1864
    %v1883 = vsel %vm1196, %v1813, %v1866
    %v1884 = vsel %vm1197, %v1814, %v1868
    %v1885 = vsel %vm1198, %v1815, %v1870
    %v1886 = vsel %vm1199, %v1816, %v1872
    %v1887 = vpack.c.bf16 %v1881, %v1880
    %v1888 = vpack.c.bf16 %v1883, %v1882
    %v1889 = vpack.c.bf16 %v1885, %v1884
    %v1890 = vpack.c.bf16 %v1886, %v1886
    %v1892 = vsel %vm884, %v1890, 0
    %1894 = vmatprep.subr.bf16.mxu0 0
    %1895 = vmatpush1.bf16.msra.mxu0 %v1887
    %1896 = vmatprep.subr.bf16.mxu0 0
    %1897 = vmatpush1.bf16.msra.mxu0 %v1888
    %1898 = vmatprep.subr.bf16.mxu0 0
    %1899 = vmatpush1.bf16.msra.mxu0 %v1889
    %1900 = vmatprep.subr.bf16.mxu0 0
    %1901 = vmatpush1.bf16.msra.mxu0 %v1892
    %1902 = vmatprep.subr.bf16.mxu0 0
    %1903 = vmatpush1.bf16.msra.mxu0 0
    %1904 = vmatprep.subr.bf16.mxu0 0
    %1905 = vmatpush1.bf16.msra.mxu0 0
    %1906 = vmatprep.subr.bf16.mxu0 0
    %1907 = vmatpush1.bf16.msra.mxu0 0
    %1908 = vmatprep.subr.bf16.mxu0 0
    %1909 = vmatpush1.bf16.msra.mxu0 0
    %1910 = vmatprep.subr.bf16.mxu0 0
    %1911 = vmatpush1.bf16.msra.mxu0 0
    %1912 = vmatprep.subr.bf16.mxu0 0
    %1913 = vmatpush1.bf16.msra.mxu0 0
    %1914 = vmatprep.subr.bf16.mxu0 0
    %1915 = vmatpush1.bf16.msra.mxu0 0
    %1916 = vmatprep.subr.bf16.mxu0 0
    %1917 = vmatpush1.bf16.msra.mxu0 0
    %1918 = vmatprep.subr.bf16.mxu0 0
    %1919 = vmatpush1.bf16.msra.mxu0 0
    %1920 = vmatprep.subr.bf16.mxu0 0
    %1921 = vmatpush1.bf16.msra.mxu0 0
    %1922 = vmatprep.subr.bf16.mxu0 0
    %1923 = vmatpush1.bf16.msra.mxu0 0
    %1924 = vmatprep.subr.bf16.mxu0 0
    %1925 = vmatpush1.bf16.msra.mxu0 0
    %1926 = vmatprep.mubr.bf16.mxu0 0
    %1927 = vmatmul.mubr.bf16.gmra.mrb[0].mxu0 %v873
    %v1928 = vpop.f32.mrb[0].mxu0
    %v1929 = vadd.f32 0.0, %v1928
    %v1930 = vpop.f32.mrb[0].mxu0
    %v1931 = vpop.f32.mrb[0].mxu0
    %v1932 = vadd.f32 0.0, %v1931
    %v1933 = vpop.f32.mrb[0].mxu0
    %1934 = vmatprep.mubr.bf16.mxu0 0
    %1935 = vmatmul.mubr.bf16.gmra.mrb[0].mxu0 %v876
    %v1936 = vpop.f32.mrb[0].mxu0
    %v1937 = vadd.f32 0.0, %v1936
    %v1938 = vpop.f32.mrb[0].mxu0
    %v1939 = vpop.f32.mrb[0].mxu0
    %v1940 = vadd.f32 0.0, %v1939
    %v1941 = vpop.f32.mrb[0].mxu0
    %1942 = vmatprep.mubr.bf16.mxu0 0
    %1943 = vmatmul.mubr.bf16.gmra.mrb[0].mxu0 %v879
    %v1944 = vpop.f32.mrb[0].mxu0
    %v1945 = vadd.f32 0.0, %v1944
    %v1946 = vpop.f32.mrb[0].mxu0
    %v1947 = vpop.f32.mrb[0].mxu0
    %v1948 = vadd.f32 0.0, %v1947
    %v1949 = vpop.f32.mrb[0].mxu0
    %1950 = vmatprep.mubr.bf16.mxu0 0
    %1951 = vmatmul.mubr.bf16.gmra.mrb[0].mxu0 %v882
    %v1952 = vpop.f32.mrb[0].mxu0
    %v1953 = vadd.f32 0.0, %v1952
    %v1954 = vpop.f32.mrb[0].mxu0
    %v1955 = vpop.f32.mrb[0].mxu0
    %v1956 = vpop.f32.mrb[0].mxu0
    %1957 = vdwg.mxu0
    %v1958 = vpack.c.bf16 %v1932, %v1929
    %v1959 = vpack.c.bf16 %v1940, %v1937
    %v1960 = vpack.c.bf16 %v1948, %v1945
    %v1961 = vpack.c.bf16 %v1953, %v1953
    %1966 = vrot.lane.b32.xlu0 %v1958, 32
    %v1967 = vpop.permute.xlu0 %1966
    %1968 = vrot.lane.b32.xlu0 %v1959, 32
    %v1969 = vpop.permute.xlu0 %1968
    %1970 = vrot.lane.b32.xlu0 %v1960, 32
    %v1971 = vpop.permute.xlu0 %1970
    %1972 = vrot.lane.b32.xlu0 %v1961, 32
    %v1973 = vpop.permute.xlu0 %1972
    %v1976 = vsel %vm968, %v1887, %v1967
    %v1979 = vsel %vm968, %v1888, %v1969
    %v1982 = vsel %vm968, %v1889, %v1971
    %v1984 = vsel %vm968, %v1890, %v1973
    %s1985 = scalar_lea.vmem %s3, 96
    %v1986 = vld [vmem:[%s1985] sm:$0xf]
    %v1987 = vld [vmem:[%s1985 + $0x4] sm:$0xf]
    %v1988 = vld [vmem:[%s1985 + $0x8] sm:$0xf]
    %v1989 = vld [vmem:[%s1985 + $0xc] sm:$0xf]
    %v1990 = vld [vmem:[%s1985 + $0x10] sm:$0xf]
    %v1991 = vld [vmem:[%s1985 + $0x14] sm:$0xf]
    %v1992 = vld [vmem:[%s1985 + $0x18] sm:$0xf]
    %v1993 = vld [vmem:[%s1985 + $0x1c] sm:$0xf]
    %s1994 = scalar_lea.vmem %s4, 12
    %v1995 = vld [vmem:[%s1994] sm:$0xf]
    %v1996 = vlaneseq
    %v1997 = vshrl.u32 %v1996, 7
    %v1998 = vsub.s32 0, %v1997
    %v1999 = vrot.slane %v1995, %v1998
    %v2008 = vunpack.c.l.b16 %v1986
    %v2009 = vunpack.c.l.b16 %v1987
    %v2010 = vunpack.c.l.b16 %v1988
    %v2011 = vunpack.c.l.b16 %v1989
    %v2012 = vunpack.c.l.b16 %v1990
    %v2013 = vunpack.c.l.b16 %v1991
    %v2014 = vunpack.c.l.b16 %v1992
    %v2015 = vunpack.c.l.b16 %v1993
    %v2016 = vpack.c.b16 %v2009, %v2008
    %v2017 = vpack.c.b16 %v2011, %v2010
    %v2018 = vpack.c.b16 %v2013, %v2012
    %v2019 = vpack.c.b16 %v2015, %v2014
    %v2024 = vsel %vm1017, %v1976, 0
    %v2026 = vsel %vm1017, %v1979, 0
    %v2028 = vsel %vm1017, %v1982, 0
    %v2030 = vsel %vm1017, %v1984, 0
    %2032 = vmatprep.subr.bf16.mxu0 0
    %2033 = vmatpush1.bf16.msra.mxu0 %v2016
    %2034 = vmatprep.subr.bf16.mxu0 0
    %2035 = vmatpush1.bf16.msra.mxu0 %v2017
    %2036 = vmatprep.subr.bf16.mxu0 0
    %2037 = vmatpush1.bf16.msra.mxu0 %v2018
    %2038 = vmatprep.subr.bf16.mxu0 0
    %2039 = vmatpush1.bf16.msra.mxu0 %v2019
    %2040 = vmatprep.subr.bf16.mxu0 0
    %2041 = vmatpush1.bf16.msra.mxu0 0
    %2042 = vmatprep.subr.bf16.mxu0 0
    %2043 = vmatpush1.bf16.msra.mxu0 0
    %2044 = vmatprep.subr.bf16.mxu0 0
    %2045 = vmatpush1.bf16.msra.mxu0 0
    %2046 = vmatprep.subr.bf16.mxu0 0
    %2047 = vmatpush1.bf16.msra.mxu0 0
    %2048 = vmatprep.subr.bf16.mxu0 0
    %2049 = vmatpush1.bf16.msra.mxu0 0
    %2050 = vmatprep.subr.bf16.mxu0 0
    %2051 = vmatpush1.bf16.msra.mxu0 0
    %2052 = vmatprep.subr.bf16.mxu0 0
    %2053 = vmatpush1.bf16.msra.mxu0 0
    %2054 = vmatprep.subr.bf16.mxu0 0
    %2055 = vmatpush1.bf16.msra.mxu0 0
    %2056 = vmatprep.subr.bf16.mxu0 0
    %2057 = vmatpush1.bf16.msra.mxu0 0
    %2058 = vmatprep.subr.bf16.mxu0 0
    %2059 = vmatpush1.bf16.msra.mxu0 0
    %2060 = vmatprep.subr.bf16.mxu0 0
    %2061 = vmatpush1.bf16.msra.mxu0 0
    %2062 = vmatprep.subr.bf16.mxu0 0
    %2063 = vmatpush1.bf16.msra.mxu0 0
    %2064 = vmatprep.mubr.bf16.mxu0 0
    %2065 = vmatmul.mubr.bf16.gmra.mrb[0].mxu0 %v2024
    %v2066 = vpop.f32.mrb[0].mxu0
    %v2067 = vadd.f32 %v1999, %v2066
    %v2068 = vpop.f32.mrb[0].mxu0
    %v2069 = vpop.f32.mrb[0].mxu0
    %v2070 = vadd.f32 %v1999, %v2069
    %v2071 = vpop.f32.mrb[0].mxu0
    %2072 = vmatprep.mubr.bf16.mxu0 0
    %2073 = vmatmul.mubr.bf16.gmra.mrb[0].mxu0 %v2026
    %v2074 = vpop.f32.mrb[0].mxu0
    %v2075 = vadd.f32 %v1999, %v2074
    %v2076 = vpop.f32.mrb[0].mxu0
    %v2077 = vpop.f32.mrb[0].mxu0
    %v2078 = vadd.f32 %v1999, %v2077
    %v2079 = vpop.f32.mrb[0].mxu0
    %2080 = vmatprep.mubr.bf16.mxu0 0
    %2081 = vmatmul.mubr.bf16.gmra.mrb[0].mxu0 %v2028
    %v2082 = vpop.f32.mrb[0].mxu0
    %v2083 = vadd.f32 %v1999, %v2082
    %v2084 = vpop.f32.mrb[0].mxu0
    %v2085 = vpop.f32.mrb[0].mxu0
    %v2086 = vadd.f32 %v1999, %v2085
    %v2087 = vpop.f32.mrb[0].mxu0
    %2088 = vmatprep.mubr.bf16.mxu0 0
    %2089 = vmatmul.mubr.bf16.gmra.mrb[0].mxu0 %v2030
    %v2090 = vpop.f32.mrb[0].mxu0
    %v2091 = vadd.f32 %v1999, %v2090
    %v2092 = vpop.f32.mrb[0].mxu0
    %v2093 = vpop.f32.mrb[0].mxu0
    %v2094 = vpop.f32.mrb[0].mxu0
    %2095 = vdwg.mxu0
    %vm2096 = vcmp.gt.f32.partialorder %v2067, 0.0
    %vm2097 = vcmp.gt.f32.partialorder %v2070, 0.0
    %vm2098 = vcmp.gt.f32.partialorder %v2075, 0.0
    %vm2099 = vcmp.gt.f32.partialorder %v2078, 0.0
    %vm2100 = vcmp.gt.f32.partialorder %v2083, 0.0
    %vm2101 = vcmp.gt.f32.partialorder %v2086, 0.0
    %vm2102 = vcmp.gt.f32.partialorder %v2091, 0.0
    %v2103 = vlaneseq
    %v2104 = vshrl.u32 %v2103, 7
    %v2105 = vsub.s32 1, %v2104
    %v2106 = vrot.slane %v1995, %v2105
    %v2107 = vmul.f32 %v2106, %v2067
    %v2108 = vmul.f32 %v2106, %v2070
    %v2109 = vmul.f32 %v2106, %v2075
    %v2110 = vmul.f32 %v2106, %v2078
    %v2111 = vmul.f32 %v2106, %v2083
    %v2112 = vmul.f32 %v2106, %v2086
    %v2113 = vmul.f32 %v2106, %v2091
    %v2114 = vsel %vm2096, %v2067, %v2107
    %v2115 = vsel %vm2097, %v2070, %v2108
    %v2116 = vsel %vm2098, %v2075, %v2109
    %v2117 = vsel %vm2099, %v2078, %v2110
    %v2118 = vsel %vm2100, %v2083, %v2111
    %v2119 = vsel %vm2101, %v2086, %v2112
    %v2120 = vsel %vm2102, %v2091, %v2113
    %v2121 = vlaneseq
    %v2122 = vshrl.u32 %v2121, 7
    %v2123 = vsub.s32 2, %v2122
    %v2124 = vrot.slane %v1995, %v2123
    %v2125 = vmul.f32 %v2114, %v2124
    %v2126 = vmul.f32 %v2115, %v2124
    %v2127 = vmul.f32 %v2116, %v2124
    %v2128 = vmul.f32 %v2117, %v2124
    %v2129 = vmul.f32 %v2118, %v2124
    %v2130 = vmul.f32 %v2119, %v2124
    %v2131 = vmul.f32 %v2120, %v2124
    %v2132 = vlaneseq
    %v2133 = vshrl.u32 %v2132, 7
    %v2134 = vsub.s32 3, %v2133
    %v2135 = vrot.slane %v1995, %v2134
    %v2136 = vadd.f32 %v2125, %v2135
    %v2137 = vadd.f32 %v2126, %v2135
    %v2138 = vadd.f32 %v2127, %v2135
    %v2139 = vadd.f32 %v2128, %v2135
    %v2140 = vadd.f32 %v2129, %v2135
    %v2141 = vadd.f32 %v2130, %v2135
    %v2142 = vadd.f32 %v2131, %v2135
    %2150 = vrot.lane.b32.xlu0 %v2136, 96
    %v2151 = vpop.permute.xlu0 %2150
    %2152 = vrot.lane.b32.xlu0 %v2137, 96
    %v2153 = vpop.permute.xlu0 %2152
    %2154 = vrot.lane.b32.xlu0 %v2138, 96
    %v2155 = vpop.permute.xlu0 %2154
    %2156 = vrot.lane.b32.xlu0 %v2139, 96
    %v2157 = vpop.permute.xlu0 %2156
    %2158 = vrot.lane.b32.xlu0 %v2140, 96
    %v2159 = vpop.permute.xlu0 %2158
    %2160 = vrot.lane.b32.xlu0 %v2141, 96
    %v2161 = vpop.permute.xlu0 %2160
    %2162 = vrot.lane.b32.xlu0 %v2142, 96
    %v2163 = vpop.permute.xlu0 %2162
    %v2171 = vsel %vm1144, %v2136, %v2151
    %v2172 = vsel %vm1145, %v2137, %v2153
    %v2173 = vsel %vm1146, %v2138, %v2155
    %v2174 = vsel %vm1147, %v2139, %v2157
    %v2175 = vsel %vm1148, %v2140, %v2159
    %v2176 = vsel %vm1149, %v2141, %v2161
    %v2177 = vsel %vm1150, %v2142, %v2163
    %2185 = vrot.lane.b32.xlu0 %v2171, 96
    %v2186 = vpop.permute.xlu0 %2185
    %2187 = vrot.lane.b32.xlu0 %v2172, 96
    %v2188 = vpop.permute.xlu0 %2187
    %2189 = vrot.lane.b32.xlu0 %v2173, 96
    %v2190 = vpop.permute.xlu0 %2189
    %2191 = vrot.lane.b32.xlu0 %v2174, 96
    %v2192 = vpop.permute.xlu0 %2191
    %2193 = vrot.lane.b32.xlu0 %v2175, 96
    %v2194 = vpop.permute.xlu0 %2193
    %2195 = vrot.lane.b32.xlu0 %v2176, 96
    %v2196 = vpop.permute.xlu0 %2195
    %2197 = vrot.lane.b32.xlu0 %v2177, 96
    %v2198 = vpop.permute.xlu0 %2197
    %v2206 = vsel %vm1193, %v2136, %v2186
    %v2207 = vsel %vm1194, %v2137, %v2188
    %v2208 = vsel %vm1195, %v2138, %v2190
    %v2209 = vsel %vm1196, %v2139, %v2192
    %v2210 = vsel %vm1197, %v2140, %v2194
    %v2211 = vsel %vm1198, %v2141, %v2196
    %v2212 = vsel %vm1199, %v2142, %v2198
    %2220 = vrot.lane.b32.xlu0 %v1554, 32
    %v2221 = vpop.permute.xlu0 %2220
    %2222 = vrot.lane.b32.xlu0 %v1555, 32
    %v2223 = vpop.permute.xlu0 %2222
    %2224 = vrot.lane.b32.xlu0 %v1556, 32
    %v2225 = vpop.permute.xlu0 %2224
    %2226 = vrot.lane.b32.xlu0 %v1557, 32
    %v2227 = vpop.permute.xlu0 %2226
    %2228 = vrot.lane.b32.xlu0 %v1558, 32
    %v2229 = vpop.permute.xlu0 %2228
    %2230 = vrot.lane.b32.xlu0 %v1559, 32
    %v2231 = vpop.permute.xlu0 %2230
    %2232 = vrot.lane.b32.xlu0 %v1560, 32
    %v2233 = vpop.permute.xlu0 %2232
    %2248 = vrot.lane.b32.xlu0 %v1880, 64
    %v2249 = vpop.permute.xlu0 %2248
    %2250 = vrot.lane.b32.xlu0 %v1881, 64
    %v2251 = vpop.permute.xlu0 %2250
    %2252 = vrot.lane.b32.xlu0 %v1882, 64
    %v2253 = vpop.permute.xlu0 %2252
    %2254 = vrot.lane.b32.xlu0 %v1883, 64
    %v2255 = vpop.permute.xlu0 %2254
    %2256 = vrot.lane.b32.xlu0 %v1884, 64
    %v2257 = vpop.permute.xlu0 %2256
    %2258 = vrot.lane.b32.xlu0 %v1885, 64
    %v2259 = vpop.permute.xlu0 %2258
    %2260 = vrot.lane.b32.xlu0 %v1886, 64
    %v2261 = vpop.permute.xlu0 %2260
    %2276 = vrot.lane.b32.xlu0 %v2206, 96
    %v2277 = vpop.permute.xlu0 %2276
    %2278 = vrot.lane.b32.xlu0 %v2207, 96
    %v2279 = vpop.permute.xlu0 %2278
    %2280 = vrot.lane.b32.xlu0 %v2208, 96
    %v2281 = vpop.permute.xlu0 %2280
    %2282 = vrot.lane.b32.xlu0 %v2209, 96
    %v2283 = vpop.permute.xlu0 %2282
    %2284 = vrot.lane.b32.xlu0 %v2210, 96
    %v2285 = vpop.permute.xlu0 %2284
    %2286 = vrot.lane.b32.xlu0 %v2211, 96
    %v2287 = vpop.permute.xlu0 %2286
    %2288 = vrot.lane.b32.xlu0 %v2212, 96
    %v2289 = vpop.permute.xlu0 %2288
    %v2297 = vsel %vm968, %v1228, %v2221
    %v2298 = vsel %vm968, %v1229, %v2223
    %v2299 = vsel %vm968, %v1230, %v2225
    %v2300 = vsel %vm968, %v1231, %v2227
    %v2301 = vsel %vm968, %v1232, %v2229
    %v2302 = vsel %vm968, %v1233, %v2231
    %v2303 = vsel %vm968, %v1234, %v2233
    %v2304 = vsel %vm1017, %v2297, %v2249
    %v2305 = vsel %vm1017, %v2298, %v2251
    %v2306 = vsel %vm1017, %v2299, %v2253
    %v2307 = vsel %vm1017, %v2300, %v2255
    %v2308 = vsel %vm1017, %v2301, %v2257
    %v2309 = vsel %vm1017, %v2302, %v2259
    %v2310 = vsel %vm1017, %v2303, %v2261
    %vm2311 = vcmask 785408
    %v2312 = vsel %vm2311, %v2304, %v2277
    %v2313 = vsel %vm2311, %v2305, %v2279
    %v2314 = vsel %vm2311, %v2306, %v2281
    %v2315 = vsel %vm2311, %v2307, %v2283
    %v2316 = vsel %vm2311, %v2308, %v2285
    %v2317 = vsel %vm2311, %v2309, %v2287
    %v2318 = vsel %vm2311, %v2310, %v2289
    %v2319 = vmul.f32 %v2312, %v133
    %v2320 = vmul.f32 %v2313, %v134
    %v2321 = vmul.f32 %v2314, %v135
    %v2322 = vmul.f32 %v2315, %v136
    %v2323 = vmul.f32 %v2316, %v137
    %v2324 = vmul.f32 %v2317, %v138
    %v2325 = vmul.f32 %v2318, %v139
    %2326 = vst [vmem:[#allocation2] sm:$0xff] %v2319
    %2327 = vst [vmem:[#allocation2 + $0x8] sm:$0xff] %v2320
    %2328 = vst [vmem:[#allocation2 + $0x10] sm:$0xff] %v2321
    %2329 = vst [vmem:[#allocation2 + $0x18] sm:$0xff] %v2322
    %2330 = vst [vmem:[#allocation2 + $0x20] sm:$0xff] %v2323
    %2331 = vst [vmem:[#allocation2 + $0x28] sm:$0xff] %v2324
    %2332 = vst [vmem:[#allocation2 + $0x30] sm:$0xff] %v2325
    %v2333 = vld [vmem:[%s5] sm:$0xff]
    %v2335 = vsel %vm871, %v2333, 0
    %2337 = vmatprep.subr.mxu0 0.0
    %2338 = vmatpush1.msra.mxu0 %v2319
    %2339 = vmatprep.subr.mxu0 0.0
    %2340 = vmatpush1.msra.mxu0 %v2320
    %2341 = vmatprep.subr.mxu0 0.0
    %2342 = vmatpush1.msra.mxu0 %v2321
    %2343 = vmatprep.subr.mxu0 0.0
    %2344 = vmatpush1.msra.mxu0 %v2322
    %2345 = vmatprep.subr.mxu0 0.0
    %2346 = vmatpush1.msra.mxu0 %v2323
    %2347 = vmatprep.subr.mxu0 0.0
    %2348 = vmatpush1.msra.mxu0 %v2324
    %2349 = vmatprep.subr.mxu0 0.0
    %2350 = vmatpush1.msra.mxu0 %v2325
    %2351 = vmatprep.subr.mxu0 0.0
    %2352 = vmatpush1.msra.mxu0 0.0
    %2353 = vmatprep.subr.mxu0 0.0
    %2354 = vmatpush1.msra.mxu0 0.0
    %2355 = vmatprep.subr.mxu0 0.0
    %2356 = vmatpush1.msra.mxu0 0.0
    %2357 = vmatprep.subr.mxu0 0.0
    %2358 = vmatpush1.msra.mxu0 0.0
    %2359 = vmatprep.subr.mxu0 0.0
    %2360 = vmatpush1.msra.mxu0 0.0
    %2361 = vmatprep.subr.mxu0 0.0
    %2362 = vmatpush1.msra.mxu0 0.0
    %2363 = vmatprep.subr.mxu0 0.0
    %2364 = vmatpush1.msra.mxu0 0.0
    %2365 = vmatprep.subr.mxu0 0.0
    %2366 = vmatpush1.msra.mxu0 0.0
    %2367 = vmatprep.subr.mxu0 0.0
    %2368 = vmatpush1.msra.mxu0 0.0
    %2369 = vmatprep.subr.mxu0 0.0
    %2370 = vmatpush1.msra.mxu0 0.0
    %2371 = vmatprep.subr.mxu0 0.0
    %2372 = vmatpush1.msra.mxu0 0.0
    %2373 = vmatprep.subr.mxu0 0.0
    %2374 = vmatpush1.msra.mxu0 0.0
    %2375 = vmatprep.subr.mxu0 0.0
    %2376 = vmatpush1.msra.mxu0 0.0
    %2377 = vmatprep.subr.mxu0 0.0
    %2378 = vmatpush1.msra.mxu0 0.0
    %2379 = vmatprep.subr.mxu0 0.0
    %2380 = vmatpush1.msra.mxu0 0.0
    %2381 = vmatprep.subr.mxu0 0.0
    %2382 = vmatpush1.msra.mxu0 0.0
    %2383 = vmatprep.subr.mxu0 0.0
    %2384 = vmatpush1.msra.mxu0 0.0
    %2385 = vmatprep.subr.mxu0 0.0
    %2386 = vmatpush1.msra.mxu0 0.0
    %2387 = vmatprep.subr.mxu0 0.0
    %2388 = vmatpush1.msra.mxu0 0.0
    %2389 = vmatprep.subr.mxu0 0.0
    %2390 = vmatpush1.msra.mxu0 0.0
    %2391 = vmatprep.subr.mxu0 0.0
    %2392 = vmatpush1.msra.mxu0 0.0
    %2393 = vmatprep.subr.mxu0 0.0
    %2394 = vmatpush1.msra.mxu0 0.0
    %2395 = vmatprep.subr.mxu0 0.0
    %2396 = vmatpush1.msra.mxu0 0.0
    %2397 = vmatprep.subr.mxu0 0.0
    %2398 = vmatpush1.msra.mxu0 0.0
    %2399 = vmatprep.subr.mxu0 0.0
    %2400 = vmatpush1.msra.mxu0 0.0
    %2401 = vmatprep.mubr.f32.mxu0 0.0
    %2402 = vmatmul.mubr.f32.gmra.mrb[0].mxu0 %v2335
    %v2403 = vpop.f32.mrb[0].mxu0
    %v2404 = vadd.f32 0.0, %v2403
    %v2405 = vpop.f32.mrb[0].mxu0
    %2406 = vdwg.mxu0
    %2407 = vst [vmem:[%s7] sm:$0x7] %v2404
    // Predicated region
    $region26: #{gcn_hetro_forward.1} parent=1 // pred_check
      _
    $region27: #{gcn_hetro_forward.1} parent=1 // pred_check_branch
      %2409 = sbr.rel (0) target = $region29
    $region28: #{gcn_hetro_forward.1} parent=1 // pred_region
      %s2411 = ssub.s32 896, 896
      %2412 = vsyncadd [#allocation3], %s2411
      %s2413 = sshll.u32 [#allocation2], 4
      %s2414 = int_to_ptr.vmem [resolvable:$true] %s2413
      %2419 = dma.vmem_to_hbm [thread:$0]  %s2414, 896, %s6, [#allocation3], 128, 128, 8
    $region29: #{gcn_hetro_forward.1} parent=1 // pred_fallthru
      _
    // Predicated region
    $region30: #{gcn_hetro_forward.1} parent=1 // pred_check
      _
    $region31: #{gcn_hetro_forward.1} parent=1 // pred_check_branch
      %2421 = sbr.rel (0) target = $region33
    $region32: #{gcn_hetro_forward.1} parent=1 // pred_region
      _
    $region33: #{gcn_hetro_forward.1} parent=1 // pred_fallthru
      _
    // Predicated region
    $region34: #{gcn_hetro_forward.1} parent=1 // pred_check
      _
    $region35: #{gcn_hetro_forward.1} parent=1 // pred_check_branch
      %2423 = sbr.rel (0) target = $region37
    $region36: #{gcn_hetro_forward.1} parent=1 // pred_region
      %2424 = dma.done [#allocation3], 896
    $region37: #{gcn_hetro_forward.1} parent=1 // pred_fallthru
      _
    // Predicated region
    $region38: #{gcn_hetro_forward.1} parent=1 // pred_check
      _
    $region39: #{gcn_hetro_forward.1} parent=1 // pred_check_branch
      %2426 = sbr.rel (0) target = $region41
    $region40: #{gcn_hetro_forward.1} parent=1 // pred_region
      _
    $region41: #{gcn_hetro_forward.1} parent=1 // pred_fallthru
      _
    %2427 = vsyncpa [#allocation3], 1

</llo_original>
